<compile_context>
chip_gen: v7x
topology: tpu7x:2x2x1
jax: 0.10.0
libtpu: 0.0.40
codegen_flags: <defaults>
</compile_context>

<pallas_src>
import numpy as np
import jax
import jax.numpy as jnp
from jax import lax
from jax.experimental import pallas as pl
from jax.experimental.pallas import tpu as pltpu


def _vmem_limit_bytes():
    """~3/4 of physical VMEM (capped) so we leave headroom on every generation."""
    try:
        info = pltpu.get_tpu_info()
        for attr in ("vmem_capacity_bytes", "vmem_bytes", "vmem_size_bytes"):
            cap = getattr(info, attr, None)
            if cap:
                return int(min(cap * 3 // 4, 100 * 1024 * 1024))
    except Exception:
        pass
    return 48 * 1024 * 1024


def _make_mass_attention_kernel(has_mask, num_heads, head_dim, q_tile):
    H, D = num_heads, head_dim

    def kernel(*refs):
        if has_mask:
            (x_ref, mask_ref,
             wq_ref, bq_ref, wk_ref, bk_ref, wv_ref, bv_ref, wo_ref, bo_ref,
             out_ref, k_cache, v_cache, ctx_ref) = refs
        else:
            (x_ref,
             wq_ref, bq_ref, wk_ref, bk_ref, wv_ref, bv_ref, wo_ref, bo_ref,
             out_ref, k_cache, v_cache, ctx_ref) = refs
            mask_ref = None

        qi = pl.program_id(1)

        # ---- K/V projections: once per batch element, cached in bf16 VMEM ----
        @pl.when(qi == 0)
        def _fill_kv():
            xkv = x_ref[...]                                            # (S, E) bf16
            k = jnp.dot(xkv, wk_ref[...],
                        preferred_element_type=jnp.float32) + bk_ref[...]
            v = jnp.dot(xkv, wv_ref[...],
                        preferred_element_type=jnp.float32) + bv_ref[...]
            k_cache[...] = k.astype(jnp.bfloat16)
            v_cache[...] = v.astype(jnp.bfloat16)

        # ---- Q projection for this q-tile (scaling folded into Wq / bq) ----
        row0 = pl.multiple_of(qi * q_tile, q_tile)
        xq = x_ref[pl.ds(row0, q_tile), :]                              # (tq, E) bf16
        q_all = (jnp.dot(xq, wq_ref[...], preferred_element_type=jnp.float32)
                 + bq_ref[...]).astype(jnp.bfloat16)                    # (tq, E)

        if has_mask:
            mask = mask_ref[...].astype(jnp.float32)                    # (tq,S) or (1,S)

        # ---- per-head attention; ctx columns written into bf16 scratch ----
        for h in range(H):
            sl = slice(h * D, (h + 1) * D)
            qh = q_all[:, sl]                                           # (tq, D) bf16
            kh = k_cache[:, sl]                                         # (S,  D) bf16
            vh = v_cache[:, sl]                                         # (S,  D) bf16
            scores = lax.dot_general(qh, kh, (((1,), (1,)), ((), ())),
                                     preferred_element_type=jnp.float32)  # (tq, S)
            if has_mask:
                scores = scores + mask
            m = jnp.max(scores, axis=-1, keepdims=True)
            e = jnp.exp(scores - m)                 # f32 exp (bf16 exp possible on v6e/v7x)
            denom = jnp.sum(e, axis=-1, keepdims=True)
            probs = (e * pl.reciprocal(denom, approx=True)).astype(jnp.bfloat16)
            ctx_h = jnp.dot(probs, vh, preferred_element_type=jnp.float32)  # (tq, D)
            ctx_ref[:, sl] = ctx_h.astype(jnp.bfloat16)

        # ---- single full-width output projection (+ bias) ----
        out = jnp.dot(ctx_ref[...], wo_ref[...],
                      preferred_element_type=jnp.float32) + bo_ref[...]
        out_ref[...] = out.astype(out_ref.dtype)

    return kernel


def mass_attention_forward(hidden_states, attention_mask, params, *, num_heads,
                           q_tile=None):
    """hidden_states: [B, T, E]; attention_mask: additive [B,1,T,S] / [B,1,1,S] or None."""
    B, T, E = hidden_states.shape
    if E % num_heads != 0:
        raise ValueError(f"embed_dim {E} must be divisible by num_heads {num_heads}")
    H = num_heads
    D = E // H
    S = T                              # self-attention, no past_key_value
    scaling = float(D) ** (-0.5)

    # q-tile: prefer >=128 tiles when T allows; whole T otherwise.  Cap at 512
    # so the (q_tile,S) softmax temporaries stay inside v7x's 64 MiB VMEM.
    if q_tile is None:
        q_tile = T
        for cand in (512, 256, 128):
            if T >= cand and T % cand == 0:
                q_tile = cand
                break
    if T % q_tile != 0:
        raise ValueError(f"seq_len {T} must be divisible by q_tile {q_tile}")
    n_q = T // q_tile

    cdt = jnp.bfloat16

    # Activations / weights in bf16 (f32 accumulation in-kernel).
    x = hidden_states.astype(cdt)

    # torch Linear weights are (out, in); transpose to (in, out).
    # Softmax scaling folded once into the q weights/bias.
    wq = (params["wq"].T.astype(jnp.float32) * scaling).astype(cdt)     # (E, E)
    wk = params["wk"].T.astype(cdt)
    wv = params["wv"].T.astype(cdt)
    wo = params["wo"].T.astype(cdt)
    bq = (params["bq"].astype(jnp.float32) * scaling).reshape(1, E)
    bk = params["bk"].astype(jnp.float32).reshape(1, E)
    bv = params["bv"].astype(jnp.float32).reshape(1, E)
    bo = params["bo"].astype(jnp.float32).reshape(1, E)

    has_mask = attention_mask is not None

    operands = [x]
    in_specs = [pl.BlockSpec((None, T, E), lambda b, qi: (b, 0, 0))]     # x, shipped once

    if has_mask:
        if attention_mask.ndim != 4 or attention_mask.shape[0] != B \
           or attention_mask.shape[-1] != S or attention_mask.shape[2] not in (1, T):
            raise ValueError(
                f"attention_mask should be broadcastable to {(B, 1, T, S)}, "
                f"got {attention_mask.shape}")
        if attention_mask.shape[2] == 1:
            # Per-key padding mask: ship tiny (B,1,S); broadcast over T in-kernel.
            mask_op = attention_mask.reshape(B, 1, S).astype(jnp.float32)
            operands.append(mask_op)
            in_specs.append(pl.BlockSpec((None, 1, S), lambda b, qi: (b, 0, 0)))
        else:
            mask_op = attention_mask.reshape(B, T, S).astype(jnp.float32)
            operands.append(mask_op)
            in_specs.append(pl.BlockSpec((None, q_tile, S), lambda b, qi: (b, qi, 0)))

    const2d = lambda b, qi: (0, 0)
    operands += [wq, bq, wk, bk, wv, bv, wo, bo]
    in_specs += [
        pl.BlockSpec((E, E), const2d), pl.BlockSpec((1, E), const2d),   # q proj
        pl.BlockSpec((E, E), const2d), pl.BlockSpec((1, E), const2d),   # k proj
        pl.BlockSpec((E, E), const2d), pl.BlockSpec((1, E), const2d),   # v proj
        pl.BlockSpec((E, E), const2d), pl.BlockSpec((1, E), const2d),   # out proj
    ]

    kernel = _make_mass_attention_kernel(has_mask, H, D, q_tile)

    out = pl.pallas_call(
        kernel,
        out_shape=jax.ShapeDtypeStruct((B, T, E), hidden_states.dtype),
        grid_spec=pltpu.PrefetchScalarGridSpec(
            num_scalar_prefetch=0,
            grid=(B, n_q),
            in_specs=in_specs,
            out_specs=pl.BlockSpec((None, q_tile, E), lambda b, qi: (b, qi, 0)),
            scratch_shapes=[
                pltpu.VMEM((S, E), cdt),        # K cache (per batch element)
                pltpu.VMEM((S, E), cdt),        # V cache
                pltpu.VMEM((q_tile, E), cdt),   # ctx columns before out-proj
            ],
        ),
        compiler_params=pltpu.CompilerParams(
            # qi must be "arbitrary": the K/V cache filled at qi==0 is reused
            # across the whole qi range of each batch element.
            dimension_semantics=("parallel", "arbitrary"),
            vmem_limit_bytes=_vmem_limit_bytes(),
        ),
    )(*operands)
    return out


def _reference(hidden_states, attention_mask, params, *, num_heads):
    """Pure-JAX replica of the PyTorch forward (self-attention path)."""
    B, T, E = hidden_states.shape
    D = E // num_heads
    scaling = float(D) ** (-0.5)
    x = hidden_states.astype(jnp.float32)

    def lin(x, w, b):
        return x @ w.T + b

    q = lin(x, params["wq"], params["bq"]) * scaling
    k = lin(x, params["wk"], params["bk"])
    v = lin(x, params["wv"], params["bv"])

    def shape(t):
        return t.reshape(B, T, num_heads, D).transpose(0, 2, 1, 3)  # (B,H,T,D)

    q, k, v = shape(q), shape(k), shape(v)
    attn = jnp.einsum("bhtd,bhsd->bhts", q, k)
    if attention_mask is not None:
        attn = attn + attention_mask.astype(jnp.float32)
    attn = jax.nn.softmax(attn, axis=-1)
    ctx = jnp.einsum("bhts,bhsd->bhtd", attn, v)
    ctx = ctx.transpose(0, 2, 1, 3).reshape(B, T, E)
    out = lin(ctx, params["wo"], params["bo"])
    return out.astype(hidden_states.dtype)


if __name__ == "__main__":
    B, T, E, H = 2, 8, 32, 4  # batch, seq, embed_dim, num_heads (head_dim = 8)

    key = jax.random.PRNGKey(0)
    keys = jax.random.split(key, 10)

    hidden_states = jax.random.normal(keys[0], (B, T, E), dtype=jnp.float32)

    # Additive attention mask (B, 1, T, T): mask the last two source positions
    # of the second batch element.
    mask_full = jnp.zeros((B, 1, T, T), dtype=jnp.float32)
    mask_full = mask_full.at[1, :, :, -2:].set(-1e9)

    # Per-key padding mask (B, 1, 1, T) -> exercises the no-broadcast path.
    mask_pad = jnp.zeros((B, 1, 1, T), dtype=jnp.float32)
    mask_pad = mask_pad.at[1, :, :, -2:].set(-1e9)

    def init_w(k):
        return 0.1 * jax.random.normal(k, (E, E), dtype=jnp.float32)

    def init_b(k):
        return 0.1 * jax.random.normal(k, (E,), dtype=jnp.float32)

    params = {
        "wq": init_w(keys[1]), "bq": init_b(keys[2]),
        "wk": init_w(keys[3]), "bk": init_b(keys[4]),
        "wv": init_w(keys[5]), "bv": init_b(keys[6]),
        "wo": init_w(keys[7]), "bo": init_b(keys[8]),
    }

    out_full = jax.block_until_ready(
        mass_attention_forward(hidden_states, mask_full, params, num_heads=H))
    out_pad = jax.block_until_ready(
        mass_attention_forward(hidden_states, mask_pad, params, num_heads=H))
    out_nomask = jax.block_until_ready(
        mass_attention_forward(hidden_states, None, params, num_heads=H))

    ref_full = _reference(hidden_states, mask_full, params, num_heads=H)
    ref_pad = _reference(hidden_states, mask_pad, params, num_heads=H)
    ref_nomask = _reference(hidden_states, None, params, num_heads=H)

    # bf16 MXU operands with f32 accumulation -> looser tolerance than pure f32.
    np.testing.assert_allclose(np.asarray(out_full), np.asarray(ref_full),
                               rtol=2e-2, atol=2e-2)
    np.testing.assert_allclose(np.asarray(out_pad), np.asarray(ref_pad),
                               rtol=2e-2, atol=2e-2)
    np.testing.assert_allclose(np.asarray(out_nomask), np.asarray(ref_nomask),
                               rtol=2e-2, atol=2e-2)

    print("KERNEL_OK")
</pallas_src>

<mosaic_0001>
module attributes {stable_mosaic.version = 11 : i64} {
  func.func @kernel(%arg0: i32, %arg1: i32, %arg2: memref<1x8x32xbf16, #tpu.memory_space<vmem>>, %arg3: memref<1x8x8xf32, #tpu.memory_space<vmem>>, %arg4: memref<32x32xbf16, #tpu.memory_space<vmem>>, %arg5: memref<1x32xf32, #tpu.memory_space<vmem>>, %arg6: memref<32x32xbf16, #tpu.memory_space<vmem>>, %arg7: memref<1x32xf32, #tpu.memory_space<vmem>>, %arg8: memref<32x32xbf16, #tpu.memory_space<vmem>>, %arg9: memref<1x32xf32, #tpu.memory_space<vmem>>, %arg10: memref<32x32xbf16, #tpu.memory_space<vmem>>, %arg11: memref<1x32xf32, #tpu.memory_space<vmem>>, %arg12: memref<1x8x32xf32, #tpu.memory_space<vmem>>, %arg13: memref<8x32xbf16, #tpu.memory_space<vmem>>, %arg14: memref<8x32xbf16, #tpu.memory_space<vmem>>, %arg15: memref<8x32xbf16, #tpu.memory_space<vmem>>) attributes {dimension_semantics = [#tpu.dimension_semantics<parallel>, #tpu.dimension_semantics<arbitrary>], iteration_bounds = array<i64: 2, 1>, scalar_prefetch = 0 : i64, scratch_operands = 3 : i64, tpu.core_type = #tpu.core_type<tc>, window_params = [{transform_indices = @transform_0, window_bounds = array<i64: 1, 8, 32>}, {transform_indices = @transform_1, window_bounds = array<i64: 1, 8, 8>}, {pipeline_mode = #tpu.pipeline_mode<synchronous>, transform_indices = @transform_2, window_bounds = array<i64: 32, 32>}, {pipeline_mode = #tpu.pipeline_mode<synchronous>, transform_indices = @transform_3, window_bounds = array<i64: 1, 32>}, {pipeline_mode = #tpu.pipeline_mode<synchronous>, transform_indices = @transform_4, window_bounds = array<i64: 32, 32>}, {pipeline_mode = #tpu.pipeline_mode<synchronous>, transform_indices = @transform_5, window_bounds = array<i64: 1, 32>}, {pipeline_mode = #tpu.pipeline_mode<synchronous>, transform_indices = @transform_6, window_bounds = array<i64: 32, 32>}, {pipeline_mode = #tpu.pipeline_mode<synchronous>, transform_indices = @transform_7, window_bounds = array<i64: 1, 32>}, {pipeline_mode = #tpu.pipeline_mode<synchronous>, transform_indices = @transform_8, window_bounds = array<i64: 32, 32>}, {pipeline_mode = #tpu.pipeline_mode<synchronous>, transform_indices = @transform_9, window_bounds = array<i64: 1, 32>}, {transform_indices = @transform_10, window_bounds = array<i64: 1, 8, 32>}]} {
    %c0_i32 = arith.constant 0 : i32
    %0 = arith.cmpi eq, %arg1, %c0_i32 : i32
    %1 = arith.extui %0 : i1 to i32
    %c0_i32_0 = arith.constant 0 : i32
    %2 = arith.cmpi ne, %1, %c0_i32_0 : i32
    scf.if %2 {
      %c0_56 = arith.constant 0 : index
      %c0_57 = arith.constant 0 : index
      %c0_58 = arith.constant 0 : index
      %101 = vector.load %arg2[%c0_56, %c0_57, %c0_58] : memref<1x8x32xbf16, #tpu.memory_space<vmem>>, vector<1x8x32xbf16>
      %102 = vector.shape_cast %101 : vector<1x8x32xbf16> to vector<8x32xbf16>
      %c0_59 = arith.constant 0 : index
      %c0_60 = arith.constant 0 : index
      %103 = vector.load %arg6[%c0_59, %c0_60] : memref<32x32xbf16, #tpu.memory_space<vmem>>, vector<32x32xbf16>
      %cst_61 = arith.constant dense<0.000000e+00> : vector<8x32xf32>
      %104 = tpu.matmul %102, %103, %cst_61 {dimension_numbers = #tpu.dot_dimension_numbers<[1], [0], [0], [1], [0, 0, 1, 1], [], []>} : vector<8x32xbf16>, vector<32x32xbf16>, vector<8x32xf32> -> vector<8x32xf32>
      %c0_62 = arith.constant 0 : index
      %c0_63 = arith.constant 0 : index
      %105 = vector.load %arg7[%c0_62, %c0_63] : memref<1x32xf32, #tpu.memory_space<vmem>>, vector<1x32xf32>
      %106 = vector.broadcast %105 : vector<1x32xf32> to vector<8x32xf32>
      %107 = arith.addf %104, %106 : vector<8x32xf32>
      %c0_64 = arith.constant 0 : index
      %c0_65 = arith.constant 0 : index
      %108 = vector.load %arg8[%c0_64, %c0_65] : memref<32x32xbf16, #tpu.memory_space<vmem>>, vector<32x32xbf16>
      %cst_66 = arith.constant dense<0.000000e+00> : vector<8x32xf32>
      %109 = tpu.matmul %102, %108, %cst_66 {dimension_numbers = #tpu.dot_dimension_numbers<[1], [0], [0], [1], [0, 0, 1, 1], [], []>} : vector<8x32xbf16>, vector<32x32xbf16>, vector<8x32xf32> -> vector<8x32xf32>
      %c0_67 = arith.constant 0 : index
      %c0_68 = arith.constant 0 : index
      %110 = vector.load %arg9[%c0_67, %c0_68] : memref<1x32xf32, #tpu.memory_space<vmem>>, vector<1x32xf32>
      %111 = vector.broadcast %110 : vector<1x32xf32> to vector<8x32xf32>
      %112 = arith.addf %109, %111 : vector<8x32xf32>
      %113 = arith.truncf %107 : vector<8x32xf32> to vector<8x32xbf16>
      %c0_69 = arith.constant 0 : index
      %c0_70 = arith.constant 0 : index
      %114 = vector.load %arg13[%c0_69, %c0_70] : memref<8x32xbf16, #tpu.memory_space<vmem>>, vector<8x32xbf16>
      tpu.vector_store %arg13[%c0_69, %c0_70], %113 {strides = array<i32>} : memref<8x32xbf16, #tpu.memory_space<vmem>>, vector<8x32xbf16>,
      %115 = arith.truncf %112 : vector<8x32xf32> to vector<8x32xbf16>
      %c0_71 = arith.constant 0 : index
      %c0_72 = arith.constant 0 : index
      %116 = vector.load %arg14[%c0_71, %c0_72] : memref<8x32xbf16, #tpu.memory_space<vmem>>, vector<8x32xbf16>
      tpu.vector_store %arg14[%c0_71, %c0_72], %115 {strides = array<i32>} : memref<8x32xbf16, #tpu.memory_space<vmem>>, vector<8x32xbf16>,
    } else {
    }
    %c8_i32 = arith.constant 8 : i32
    %3 = arith.muli %arg1, %c8_i32 : i32
    %4 = tpu.assume_multiple %3, 8 : i32
    %c0 = arith.constant 0 : index
    %5 = arith.index_cast %4 : i32 to index
    %c0_1 = arith.constant 0 : index
    %6 = vector.load %arg2[%c0, %5, %c0_1] : memref<1x8x32xbf16, #tpu.memory_space<vmem>>, vector<1x8x32xbf16>
    %7 = vector.shape_cast %6 : vector<1x8x32xbf16> to vector<8x32xbf16>
    %c0_2 = arith.constant 0 : index
    %c0_3 = arith.constant 0 : index
    %8 = vector.load %arg4[%c0_2, %c0_3] : memref<32x32xbf16, #tpu.memory_space<vmem>>, vector<32x32xbf16>
    %cst = arith.constant dense<0.000000e+00> : vector<8x32xf32>
    %9 = tpu.matmul %7, %8, %cst {dimension_numbers = #tpu.dot_dimension_numbers<[1], [0], [0], [1], [0, 0, 1, 1], [], []>} : vector<8x32xbf16>, vector<32x32xbf16>, vector<8x32xf32> -> vector<8x32xf32>
    %c0_4 = arith.constant 0 : index
    %c0_5 = arith.constant 0 : index
    %10 = vector.load %arg5[%c0_4, %c0_5] : memref<1x32xf32, #tpu.memory_space<vmem>>, vector<1x32xf32>
    %11 = vector.broadcast %10 : vector<1x32xf32> to vector<8x32xf32>
    %12 = arith.addf %9, %11 : vector<8x32xf32>
    %13 = arith.truncf %12 : vector<8x32xf32> to vector<8x32xbf16>
    %c0_6 = arith.constant 0 : index
    %c0_7 = arith.constant 0 : index
    %c0_8 = arith.constant 0 : index
    %14 = vector.load %arg3[%c0_6, %c0_7, %c0_8] : memref<1x8x8xf32, #tpu.memory_space<vmem>>, vector<1x8x8xf32>
    %15 = vector.shape_cast %14 : vector<1x8x8xf32> to vector<8x8xf32>
    %16 = vector.extract_strided_slice %13 {offsets = [0, 0], sizes = [8, 8], strides = [1, 1]} : vector<8x32xbf16> to vector<8x8xbf16>
    %c0_9 = arith.constant 0 : index
    %c0_10 = arith.constant 0 : index
    %17 = vector.load %arg13[%c0_9, %c0_10] : memref<8x32xbf16, #tpu.memory_space<vmem>>, vector<8x8xbf16>
    %c0_11 = arith.constant 0 : index
    %c0_12 = arith.constant 0 : index
    %18 = vector.load %arg14[%c0_11, %c0_12] : memref<8x32xbf16, #tpu.memory_space<vmem>>, vector<8x8xbf16>
    %cst_13 = arith.constant dense<0.000000e+00> : vector<8x8xf32>
    %19 = tpu.matmul %16, %17, %cst_13 {dimension_numbers = #tpu.dot_dimension_numbers<[1], [1], [0], [0], [0, 0, 1, 0], [], []>} : vector<8x8xbf16>, vector<8x8xbf16>, vector<8x8xf32> -> vector<8x8xf32>
    %20 = arith.addf %19, %15 : vector<8x8xf32>
    %cst_14 = arith.constant dense<0xFF800000> : vector<8xf32>
    %21 = vector.multi_reduction <maximumf>, %20, %cst_14 [1] : vector<8x8xf32> to vector<8xf32>
    %22 = vector.shape_cast %21 : vector<8xf32> to vector<8x1xf32>
    %23 = vector.broadcast %22 : vector<8x1xf32> to vector<8x8xf32>
    %24 = arith.subf %20, %23 : vector<8x8xf32>
    %25 = math.exp %24 : vector<8x8xf32>
    %cst_15 = arith.constant dense<0.000000e+00> : vector<8xf32>
    %26 = vector.multi_reduction <add>, %25, %cst_15 [1] : vector<8x8xf32> to vector<8xf32>
    %27 = vector.shape_cast %26 : vector<8xf32> to vector<8x1xf32>
    %28 = tpu.reciprocal %27 {approx = true} : vector<8x1xf32> -> vector<8x1xf32>
    %29 = vector.broadcast %28 : vector<8x1xf32> to vector<8x8xf32>
    %30 = arith.mulf %25, %29 : vector<8x8xf32>
    %31 = arith.truncf %30 : vector<8x8xf32> to vector<8x8xbf16>
    %cst_16 = arith.constant dense<0.000000e+00> : vector<8x8xf32>
    %32 = tpu.matmul %31, %18, %cst_16 {dimension_numbers = #tpu.dot_dimension_numbers<[1], [0], [0], [1], [0, 0, 1, 1], [], []>} : vector<8x8xbf16>, vector<8x8xbf16>, vector<8x8xf32> -> vector<8x8xf32>
    %33 = arith.truncf %32 : vector<8x8xf32> to vector<8x8xbf16>
    %c0_17 = arith.constant 0 : index
    %c0_18 = arith.constant 0 : index
    %34 = vector.load %arg15[%c0_17, %c0_18] : memref<8x32xbf16, #tpu.memory_space<vmem>>, vector<8x8xbf16>
    tpu.vector_store %arg15[%c0_17, %c0_18], %33 {strides = array<i32>} : memref<8x32xbf16, #tpu.memory_space<vmem>>, vector<8x8xbf16>,
    %35 = vector.extract_strided_slice %13 {offsets = [0, 8], sizes = [8, 8], strides = [1, 1]} : vector<8x32xbf16> to vector<8x8xbf16>
    %c0_19 = arith.constant 0 : index
    %c8 = arith.constant 8 : index
    %36 = vector.load %arg13[%c0_19, %c8] : memref<8x32xbf16, #tpu.memory_space<vmem>>, vector<8x8xbf16>
    %c0_20 = arith.constant 0 : index
    %c8_21 = arith.constant 8 : index
    %37 = vector.load %arg14[%c0_20, %c8_21] : memref<8x32xbf16, #tpu.memory_space<vmem>>, vector<8x8xbf16>
    %cst_22 = arith.constant dense<0.000000e+00> : vector<8x8xf32>
    %38 = tpu.matmul %35, %36, %cst_22 {dimension_numbers = #tpu.dot_dimension_numbers<[1], [1], [0], [0], [0, 0, 1, 0], [], []>} : vector<8x8xbf16>, vector<8x8xbf16>, vector<8x8xf32> -> vector<8x8xf32>
    %39 = arith.addf %38, %15 : vector<8x8xf32>
    %cst_23 = arith.constant dense<0xFF800000> : vector<8xf32>
    %40 = vector.multi_reduction <maximumf>, %39, %cst_23 [1] : vector<8x8xf32> to vector<8xf32>
    %41 = vector.shape_cast %40 : vector<8xf32> to vector<8x1xf32>
    %42 = vector.broadcast %41 : vector<8x1xf32> to vector<8x8xf32>
    %43 = arith.subf %39, %42 : vector<8x8xf32>
    %44 = math.exp %43 : vector<8x8xf32>
    %cst_24 = arith.constant dense<0.000000e+00> : vector<8xf32>
    %45 = vector.multi_reduction <add>, %44, %cst_24 [1] : vector<8x8xf32> to vector<8xf32>
    %46 = vector.shape_cast %45 : vector<8xf32> to vector<8x1xf32>
    %47 = tpu.reciprocal %46 {approx = true} : vector<8x1xf32> -> vector<8x1xf32>
    %48 = vector.broadcast %47 : vector<8x1xf32> to vector<8x8xf32>
    %49 = arith.mulf %44, %48 : vector<8x8xf32>
    %50 = arith.truncf %49 : vector<8x8xf32> to vector<8x8xbf16>
    %cst_25 = arith.constant dense<0.000000e+00> : vector<8x8xf32>
    %51 = tpu.matmul %50, %37, %cst_25 {dimension_numbers = #tpu.dot_dimension_numbers<[1], [0], [0], [1], [0, 0, 1, 1], [], []>} : vector<8x8xbf16>, vector<8x8xbf16>, vector<8x8xf32> -> vector<8x8xf32>
    %52 = arith.truncf %51 : vector<8x8xf32> to vector<8x8xbf16>
    %c0_26 = arith.constant 0 : index
    %c8_27 = arith.constant 8 : index
    %53 = vector.load %arg15[%c0_26, %c8_27] : memref<8x32xbf16, #tpu.memory_space<vmem>>, vector<8x8xbf16>
    tpu.vector_store %arg15[%c0_26, %c8_27], %52 {strides = array<i32>} : memref<8x32xbf16, #tpu.memory_space<vmem>>, vector<8x8xbf16>,
    %54 = vector.extract_strided_slice %13 {offsets = [0, 16], sizes = [8, 8], strides = [1, 1]} : vector<8x32xbf16> to vector<8x8xbf16>
    %c0_28 = arith.constant 0 : index
    %c16 = arith.constant 16 : index
    %55 = vector.load %arg13[%c0_28, %c16] : memref<8x32xbf16, #tpu.memory_space<vmem>>, vector<8x8xbf16>
    %c0_29 = arith.constant 0 : index
    %c16_30 = arith.constant 16 : index
    %56 = vector.load %arg14[%c0_29, %c16_30] : memref<8x32xbf16, #tpu.memory_space<vmem>>, vector<8x8xbf16>
    %cst_31 = arith.constant dense<0.000000e+00> : vector<8x8xf32>
    %57 = tpu.matmul %54, %55, %cst_31 {dimension_numbers = #tpu.dot_dimension_numbers<[1], [1], [0], [0], [0, 0, 1, 0], [], []>} : vector<8x8xbf16>, vector<8x8xbf16>, vector<8x8xf32> -> vector<8x8xf32>
    %58 = arith.addf %57, %15 : vector<8x8xf32>
    %cst_32 = arith.constant dense<0xFF800000> : vector<8xf32>
    %59 = vector.multi_reduction <maximumf>, %58, %cst_32 [1] : vector<8x8xf32> to vector<8xf32>
    %60 = vector.shape_cast %59 : vector<8xf32> to vector<8x1xf32>
    %61 = vector.broadcast %60 : vector<8x1xf32> to vector<8x8xf32>
    %62 = arith.subf %58, %61 : vector<8x8xf32>
    %63 = math.exp %62 : vector<8x8xf32>
    %cst_33 = arith.constant dense<0.000000e+00> : vector<8xf32>
    %64 = vector.multi_reduction <add>, %63, %cst_33 [1] : vector<8x8xf32> to vector<8xf32>
    %65 = vector.shape_cast %64 : vector<8xf32> to vector<8x1xf32>
    %66 = tpu.reciprocal %65 {approx = true} : vector<8x1xf32> -> vector<8x1xf32>
    %67 = vector.broadcast %66 : vector<8x1xf32> to vector<8x8xf32>
    %68 = arith.mulf %63, %67 : vector<8x8xf32>
    %69 = arith.truncf %68 : vector<8x8xf32> to vector<8x8xbf16>
    %cst_34 = arith.constant dense<0.000000e+00> : vector<8x8xf32>
    %70 = tpu.matmul %69, %56, %cst_34 {dimension_numbers = #tpu.dot_dimension_numbers<[1], [0], [0], [1], [0, 0, 1, 1], [], []>} : vector<8x8xbf16>, vector<8x8xbf16>, vector<8x8xf32> -> vector<8x8xf32>
    %71 = arith.truncf %70 : vector<8x8xf32> to vector<8x8xbf16>
    %c0_35 = arith.constant 0 : index
    %c16_36 = arith.constant 16 : index
    %72 = vector.load %arg15[%c0_35, %c16_36] : memref<8x32xbf16, #tpu.memory_space<vmem>>, vector<8x8xbf16>
    tpu.vector_store %arg15[%c0_35, %c16_36], %71 {strides = array<i32>} : memref<8x32xbf16, #tpu.memory_space<vmem>>, vector<8x8xbf16>,
    %73 = vector.extract_strided_slice %13 {offsets = [0, 24], sizes = [8, 8], strides = [1, 1]} : vector<8x32xbf16> to vector<8x8xbf16>
    %c0_37 = arith.constant 0 : index
    %c24 = arith.constant 24 : index
    %74 = vector.load %arg13[%c0_37, %c24] : memref<8x32xbf16, #tpu.memory_space<vmem>>, vector<8x8xbf16>
    %c0_38 = arith.constant 0 : index
    %c24_39 = arith.constant 24 : index
    %75 = vector.load %arg14[%c0_38, %c24_39] : memref<8x32xbf16, #tpu.memory_space<vmem>>, vector<8x8xbf16>
    %cst_40 = arith.constant dense<0.000000e+00> : vector<8x8xf32>
    %76 = tpu.matmul %73, %74, %cst_40 {dimension_numbers = #tpu.dot_dimension_numbers<[1], [1], [0], [0], [0, 0, 1, 0], [], []>} : vector<8x8xbf16>, vector<8x8xbf16>, vector<8x8xf32> -> vector<8x8xf32>
    %77 = arith.addf %76, %15 : vector<8x8xf32>
    %cst_41 = arith.constant dense<0xFF800000> : vector<8xf32>
    %78 = vector.multi_reduction <maximumf>, %77, %cst_41 [1] : vector<8x8xf32> to vector<8xf32>
    %79 = vector.shape_cast %78 : vector<8xf32> to vector<8x1xf32>
    %80 = vector.broadcast %79 : vector<8x1xf32> to vector<8x8xf32>
    %81 = arith.subf %77, %80 : vector<8x8xf32>
    %82 = math.exp %81 : vector<8x8xf32>
    %cst_42 = arith.constant dense<0.000000e+00> : vector<8xf32>
    %83 = vector.multi_reduction <add>, %82, %cst_42 [1] : vector<8x8xf32> to vector<8xf32>
    %84 = vector.shape_cast %83 : vector<8xf32> to vector<8x1xf32>
    %85 = tpu.reciprocal %84 {approx = true} : vector<8x1xf32> -> vector<8x1xf32>
    %86 = vector.broadcast %85 : vector<8x1xf32> to vector<8x8xf32>
    %87 = arith.mulf %82, %86 : vector<8x8xf32>
    %88 = arith.truncf %87 : vector<8x8xf32> to vector<8x8xbf16>
    %cst_43 = arith.constant dense<0.000000e+00> : vector<8x8xf32>
    %89 = tpu.matmul %88, %75, %cst_43 {dimension_numbers = #tpu.dot_dimension_numbers<[1], [0], [0], [1], [0, 0, 1, 1], [], []>} : vector<8x8xbf16>, vector<8x8xbf16>, vector<8x8xf32> -> vector<8x8xf32>
    %90 = arith.truncf %89 : vector<8x8xf32> to vector<8x8xbf16>
    %c0_44 = arith.constant 0 : index
    %c24_45 = arith.constant 24 : index
    %91 = vector.load %arg15[%c0_44, %c24_45] : memref<8x32xbf16, #tpu.memory_space<vmem>>, vector<8x8xbf16>
    tpu.vector_store %arg15[%c0_44, %c24_45], %90 {strides = array<i32>} : memref<8x32xbf16, #tpu.memory_space<vmem>>, vector<8x8xbf16>,
    %c0_46 = arith.constant 0 : index
    %c0_47 = arith.constant 0 : index
    %92 = vector.load %arg15[%c0_46, %c0_47] : memref<8x32xbf16, #tpu.memory_space<vmem>>, vector<8x32xbf16>
    %c0_48 = arith.constant 0 : index
    %c0_49 = arith.constant 0 : index
    %93 = vector.load %arg10[%c0_48, %c0_49] : memref<32x32xbf16, #tpu.memory_space<vmem>>, vector<32x32xbf16>
    %cst_50 = arith.constant dense<0.000000e+00> : vector<8x32xf32>
    %94 = tpu.matmul %92, %93, %cst_50 {dimension_numbers = #tpu.dot_dimension_numbers<[1], [0], [0], [1], [0, 0, 1, 1], [], []>} : vector<8x32xbf16>, vector<32x32xbf16>, vector<8x32xf32> -> vector<8x32xf32>
    %c0_51 = arith.constant 0 : index
    %c0_52 = arith.constant 0 : index
    %95 = vector.load %arg11[%c0_51, %c0_52] : memref<1x32xf32, #tpu.memory_space<vmem>>, vector<1x32xf32>
    %96 = vector.broadcast %95 : vector<1x32xf32> to vector<8x32xf32>
    %97 = arith.addf %94, %96 : vector<8x32xf32>
    %c0_53 = arith.constant 0 : index
    %c0_54 = arith.constant 0 : index
    %c0_55 = arith.constant 0 : index
    %98 = vector.load %arg12[%c0_53, %c0_54, %c0_55] : memref<1x8x32xf32, #tpu.memory_space<vmem>>, vector<1x8x32xf32>
    %99 = vector.shape_cast %98 : vector<1x8x32xf32> to vector<8x32xf32>
    %100 = vector.shape_cast %97 : vector<8x32xf32> to vector<1x8x32xf32>
    tpu.vector_store %arg12[%c0_53, %c0_54, %c0_55], %100 {strides = array<i32>} : memref<1x8x32xf32, #tpu.memory_space<vmem>>, vector<1x8x32xf32>,
    return
  }
  func.func @transform_0(%arg0: i32, %arg1: i32) -> (i32, i32, i32) {
    %c0_i32 = arith.constant 0 : i32
    %c0_i32_0 = arith.constant 0 : i32
    %c0_i32_1 = arith.constant 0 : i32
    return %arg0, %c0_i32, %c0_i32_0 : i32, i32, i32
  }
  func.func @transform_1(%arg0: i32, %arg1: i32) -> (i32, i32, i32) {
    %c0_i32 = arith.constant 0 : i32
    %c0_i32_0 = arith.constant 0 : i32
    return %arg0, %arg1, %c0_i32 : i32, i32, i32
  }
  func.func @transform_2(%arg0: i32, %arg1: i32) -> (i32, i32) {
    %c0_i32 = arith.constant 0 : i32
    %c0_i32_0 = arith.constant 0 : i32
    %c0_i32_1 = arith.constant 0 : i32
    return %c0_i32, %c0_i32_0 : i32, i32
  }
  func.func @transform_3(%arg0: i32, %arg1: i32) -> (i32, i32) {
    %c0_i32 = arith.constant 0 : i32
    %c0_i32_0 = arith.constant 0 : i32
    %c0_i32_1 = arith.constant 0 : i32
    return %c0_i32, %c0_i32_0 : i32, i32
  }
  func.func @transform_4(%arg0: i32, %arg1: i32) -> (i32, i32) {
    %c0_i32 = arith.constant 0 : i32
    %c0_i32_0 = arith.constant 0 : i32
    %c0_i32_1 = arith.constant 0 : i32
    return %c0_i32, %c0_i32_0 : i32, i32
  }
  func.func @transform_5(%arg0: i32, %arg1: i32) -> (i32, i32) {
    %c0_i32 = arith.constant 0 : i32
    %c0_i32_0 = arith.constant 0 : i32
    %c0_i32_1 = arith.constant 0 : i32
    return %c0_i32, %c0_i32_0 : i32, i32
  }
  func.func @transform_6(%arg0: i32, %arg1: i32) -> (i32, i32) {
    %c0_i32 = arith.constant 0 : i32
    %c0_i32_0 = arith.constant 0 : i32
    %c0_i32_1 = arith.constant 0 : i32
    return %c0_i32, %c0_i32_0 : i32, i32
  }
  func.func @transform_7(%arg0: i32, %arg1: i32) -> (i32, i32) {
    %c0_i32 = arith.constant 0 : i32
    %c0_i32_0 = arith.constant 0 : i32
    %c0_i32_1 = arith.constant 0 : i32
    return %c0_i32, %c0_i32_0 : i32, i32
  }
  func.func @transform_8(%arg0: i32, %arg1: i32) -> (i32, i32) {
    %c0_i32 = arith.constant 0 : i32
    %c0_i32_0 = arith.constant 0 : i32
    %c0_i32_1 = arith.constant 0 : i32
    return %c0_i32, %c0_i32_0 : i32, i32
  }
  func.func @transform_9(%arg0: i32, %arg1: i32) -> (i32, i32) {
    %c0_i32 = arith.constant 0 : i32
    %c0_i32_0 = arith.constant 0 : i32
    %c0_i32_1 = arith.constant 0 : i32
    return %c0_i32, %c0_i32_0 : i32, i32
  }
  func.func @transform_10(%arg0: i32, %arg1: i32) -> (i32, i32, i32) {
    %c0_i32 = arith.constant 0 : i32
    %c0_i32_0 = arith.constant 0 : i32
    return %arg0, %arg1, %c0_i32 : i32, i32, i32
  }
}

</mosaic_0001>

<llo_original>
// kernel: tpu_custom_call.1
$region0: #{tpu_custom_call.1}
  #allocation0 [shape = 'u32[]', space=smem, size = 0x4, offset = 0x4, fixed_abs, tag = 'smem constant byte address 0x4 - core index']
  #allocation1 [shape = 'u32[144,128]{1,0:T(1,128)}', space=vmem, size = 0x12000, scoped, tag = 'internal scratch']
  #allocation2 [shape = 'bf16[8,32]{1,0:T(8,128)(2,1)}', space=vmem, size = 0x800, scoped, tag = 'scratch operand']
  #allocation3 [shape = 'bf16[8,32]{1,0:T(8,128)(2,1)}', space=vmem, size = 0x800, scoped, tag = 'scratch operand']
  #allocation4 [shape = 'bf16[8,32]{1,0:T(8,128)(2,1)}', space=vmem, size = 0x800, scoped, tag = 'scratch operand']
  %s0 = inlined_call_operand.hbm [shape: bf16[2,8,32], index: 0, kind: input, shape index: {}]
  %s1 = inlined_call_operand.hbm [shape: f32[2,8,8], index: 1, kind: input, shape index: {}]
  %s2 = inlined_call_operand.hbm [shape: bf16[32,32], index: 2, kind: input, shape index: {}]
  %s3 = inlined_call_operand.vmem [shape: f32[1,32], index: 3, kind: input, shape index: {}]
  %s4 = inlined_call_operand.hbm [shape: bf16[32,32], index: 4, kind: input, shape index: {}]
  %s5 = inlined_call_operand.vmem [shape: f32[1,32], index: 5, kind: input, shape index: {}]
  %s6 = inlined_call_operand.vmem [shape: bf16[32,32], index: 6, kind: input, shape index: {}]
  %s7 = inlined_call_operand.vmem [shape: f32[1,32], index: 7, kind: input, shape index: {}]
  %s8 = inlined_call_operand.hbm [shape: bf16[32,32], index: 8, kind: input, shape index: {}]
  %s9 = inlined_call_operand.vmem [shape: f32[1,32], index: 9, kind: input, shape index: {}]
  %s10 = inlined_call_operand.hbm [shape: f32[2,8,32], index: 10, kind: output, shape index: {}]
  %s11 = sld [smem:[#allocation0]]
  $region97: #{tpu_custom_call.1} parent=0
    _
  %s13 = ssub.s32 1, %s11
  %s14 = scalar_select 0, %s13, %s11
  $region1: #{tpu_custom_call.1} parent=0
    #allocation5 [shape = 'u8[4096]{0}', space=vmem, size = 0x1000, scoped, tag = 'input window, operand 0']
    #allocation6 [shape = 's32[2]{0}', space=sflag, size = 0x8, scoped, tag = 'scoped memory for tpu_custom_call.1']
    #allocation7 [shape = 's32[2]{0}', space=sflag, size = 0x8, scoped, tag = 'scoped memory for tpu_custom_call.1']
    #allocation8 [shape = 'u8[8192]{0}', space=vmem, size = 0x2000, scoped, tag = 'input window, operand 1']
    #allocation9 [shape = 's32[2]{0}', space=sflag, size = 0x8, scoped, tag = 'scoped memory for tpu_custom_call.1']
    #allocation10 [shape = 'u8[8192]{0}', space=vmem, size = 0x2000, scoped, tag = 'input window, operand 2, single buffered']
    #allocation11 [shape = 'u8[8192]{0}', space=vmem, size = 0x2000, scoped, tag = 'input window, operand 4, single buffered']
    #allocation12 [shape = 's32[1]{0}', space=sflag, size = 0x4, scoped, tag = 'scoped memory for tpu_custom_call.1']
    #allocation13 [shape = 'u8[8192]{0}', space=vmem, size = 0x2000, scoped, tag = 'input window, operand 8, single buffered']
    #allocation14 [shape = 'u8[8192]{0}', space=vmem, size = 0x2000, scoped, tag = 'output window, operand 0']
    %15 = vsyncpa [#allocation6], 0
    %s16 = scalar_lea.sflag [#allocation6], 1
    %17 = vsyncpa %s16, 0
    %18 = vsyncpa [#allocation9], 0
    %s19 = scalar_lea.sflag [#allocation9], 1
    %20 = vsyncpa %s19, 0
    %21 = vsyncpa [#allocation12], 0
    %22 = vsyncpa [#allocation7], 0
    %s23 = scalar_lea.sflag [#allocation7], 1
    %24 = vsyncpa %s23, 0
    loop: start=0, step=1, limit=4
    $region2: #{tpu_custom_call.1} parent=1 // loop_pre_header
      _
    $region3: #{tpu_custom_call.1} parent=1 // loop_header
      %s26 = sphi 0, %s30
      %p27 = scmp.ge.s32.totalorder %s26, 4
      %s33 = sphi 0, %s45
      %s34 = sphi 0, %s41
      %s35 = sphi 0, %s33
      %s36 = sphi 0, %s34
      %s37 = sphi 0, %s35
      %s38 = sphi 0, %s36
      %s48 = sphi 0, %s50
      %s51 = sphi 0, %s48
      %s52 = sphi 0, %s51
      %s68 = sphi 0, %s52
      %s76 = sphi 0, %s78
      %s79 = sphi 0, %s76
      %s80 = sphi 0, %s79
      %s96 = sphi 0, %s80
      %s100 = sphi 0, %s100
      %s102 = sphi 0, %s100
      %s103 = sphi 0, %s102
      %s117 = sphi 0, %s103
      %s121 = sphi 0, %s121
      %s123 = sphi 0, %s121
      %s124 = sphi 0, %s123
      %s138 = sphi 0, %s124
      %s142 = sphi 0, %s142
      %s144 = sphi 0, %s142
      %s145 = sphi 0, %s144
      %s159 = sphi 0, %s145
      %s163 = sphi 0, %s163
      %s165 = sphi 0, %s163
      %s166 = sphi 0, %s165
      %s180 = sphi 0, %s166
      %s184 = sphi 0, %s184
      %s186 = sphi 0, %s184
      %s187 = sphi 0, %s186
      %s201 = sphi 0, %s187
      %s205 = sphi 0, %s205
      %s207 = sphi 0, %s205
      %s208 = sphi 0, %s207
      %s222 = sphi 0, %s208
      %s226 = sphi 0, %s226
      %s228 = sphi 0, %s226
      %s229 = sphi 0, %s228
      %s243 = sphi 0, %s229
      %s247 = sphi 0, %s247
      %s249 = sphi 0, %s247
      %s250 = sphi 0, %s249
      %s264 = sphi 0, %s250
      %s272 = sphi 0, %s274
      %s275 = sphi 0, %s272
      %s276 = sphi 0, %s275
      %s292 = sphi 0, %s276
    $region4: #{tpu_custom_call.1} parent=1 // loop_header_branch
      %29 = sbr.rel (%p27) target = $region8
    $region5: #{tpu_custom_call.1} parent=1 // loop_body
      %s31 = ssub.s32 %s26, 1
      %s32 = ssub.s32 %s26, 2
      %s39 = sadd.s32 1, %s34
      %p40 = scmp.ge.s32.totalorder %s39, 1
      %s41 = scalar_select %p40, 0, %s39
      %s42 = sadd.s32 1, %s33
      %s43 = scalar_select %p40, %s42, %s33
      %p44 = scmp.ge.s32.totalorder %s43, 2
      %s45 = scalar_select %p44, 0, %s43
      %s46 = ssub.s32 %s33, %s45
      %p47 = scmp.eq.s32.totalorder %s46, 0
      %s49 = sadd.s32 %s48, 1
      %s50 = scalar_select %p47, %s48, %s49
      %p53 = pneg %p47
      %p54 = scmp.eq.s32.totalorder %s26, 1
      %p55 = por %p53, %p54
      %p56 = scmp.ne.s32.totalorder %s48, %s51
      %p57 = scmp.eq.s32.totalorder %s26, 0
      %p58 = por %p56, %p57
      %p59 = scmp.ne.s32.totalorder %s48, %s51
      %p60 = scmp.eq.s32.totalorder %s31, 1
      %p61 = por %p59, %p60
      %p62 = scmp.ne.s32.totalorder %s51, %s52
      %p63 = scmp.eq.s32.totalorder %s31, 0
      %p64 = por %p62, %p63
      %p65 = scmp.ne.s32.totalorder %s51, %s52
      %p66 = scmp.eq.s32.totalorder %s32, 1
      %p67 = por %p65, %p66
      %p69 = scmp.ne.s32.totalorder %s52, %s68
      %p70 = scmp.eq.s32.totalorder %s32, 0
      %p71 = por %p69, %p70
      %s72 = ssub.s32 %s33, %s45
      %s73 = ssub.s32 %s34, %s41
      %s74 = sor.u32 %s72, %s73
      %p75 = scmp.eq.s32.totalorder %s74, 0
      %s77 = sadd.s32 %s76, 1
      %s78 = scalar_select %p75, %s76, %s77
      %p81 = pneg %p75
      %p82 = scmp.eq.s32.totalorder %s26, 1
      %p83 = por %p81, %p82
      %p84 = scmp.ne.s32.totalorder %s76, %s79
      %p85 = scmp.eq.s32.totalorder %s26, 0
      %p86 = por %p84, %p85
      %p87 = scmp.ne.s32.totalorder %s76, %s79
      %p88 = scmp.eq.s32.totalorder %s31, 1
      %p89 = por %p87, %p88
      %p90 = scmp.ne.s32.totalorder %s79, %s80
      %p91 = scmp.eq.s32.totalorder %s31, 0
      %p92 = por %p90, %p91
      %p93 = scmp.ne.s32.totalorder %s79, %s80
      %p94 = scmp.eq.s32.totalorder %s32, 1
      %p95 = por %p93, %p94
      %p97 = scmp.ne.s32.totalorder %s80, %s96
      %p98 = scmp.eq.s32.totalorder %s32, 0
      %p99 = por %p97, %p98
      %s101 = sadd.s32 %s100, 1
      %p104 = scmp.eq.s32.totalorder %s26, 1
      %p105 = scmp.ne.s32.totalorder %s100, %s102
      %p106 = scmp.eq.s32.totalorder %s26, 0
      %p107 = por %p105, %p106
      %p108 = scmp.ne.s32.totalorder %s100, %s102
      %p109 = scmp.eq.s32.totalorder %s31, 1
      %p110 = por %p108, %p109
      %p111 = scmp.ne.s32.totalorder %s102, %s103
      %p112 = scmp.eq.s32.totalorder %s31, 0
      %p113 = por %p111, %p112
      %p114 = scmp.ne.s32.totalorder %s102, %s103
      %p115 = scmp.eq.s32.totalorder %s32, 1
      %p116 = por %p114, %p115
      %p118 = scmp.ne.s32.totalorder %s103, %s117
      %p119 = scmp.eq.s32.totalorder %s32, 0
      %p120 = por %p118, %p119
      %s122 = sadd.s32 %s121, 1
      %p125 = scmp.eq.s32.totalorder %s26, 1
      %p126 = scmp.ne.s32.totalorder %s121, %s123
      %p127 = scmp.eq.s32.totalorder %s26, 0
      %p128 = por %p126, %p127
      %p129 = scmp.ne.s32.totalorder %s121, %s123
      %p130 = scmp.eq.s32.totalorder %s31, 1
      %p131 = por %p129, %p130
      %p132 = scmp.ne.s32.totalorder %s123, %s124
      %p133 = scmp.eq.s32.totalorder %s31, 0
      %p134 = por %p132, %p133
      %p135 = scmp.ne.s32.totalorder %s123, %s124
      %p136 = scmp.eq.s32.totalorder %s32, 1
      %p137 = por %p135, %p136
      %p139 = scmp.ne.s32.totalorder %s124, %s138
      %p140 = scmp.eq.s32.totalorder %s32, 0
      %p141 = por %p139, %p140
      %s143 = sadd.s32 %s142, 1
      %p146 = scmp.eq.s32.totalorder %s26, 1
      %p147 = scmp.ne.s32.totalorder %s142, %s144
      %p148 = scmp.eq.s32.totalorder %s26, 0
      %p149 = por %p147, %p148
      %p150 = scmp.ne.s32.totalorder %s142, %s144
      %p151 = scmp.eq.s32.totalorder %s31, 1
      %p152 = por %p150, %p151
      %p153 = scmp.ne.s32.totalorder %s144, %s145
      %p154 = scmp.eq.s32.totalorder %s31, 0
      %p155 = por %p153, %p154
      %p156 = scmp.ne.s32.totalorder %s144, %s145
      %p157 = scmp.eq.s32.totalorder %s32, 1
      %p158 = por %p156, %p157
      %p160 = scmp.ne.s32.totalorder %s145, %s159
      %p161 = scmp.eq.s32.totalorder %s32, 0
      %p162 = por %p160, %p161
      %s164 = sadd.s32 %s163, 1
      %p167 = scmp.eq.s32.totalorder %s26, 1
      %p168 = scmp.ne.s32.totalorder %s163, %s165
      %p169 = scmp.eq.s32.totalorder %s26, 0
      %p170 = por %p168, %p169
      %p171 = scmp.ne.s32.totalorder %s163, %s165
      %p172 = scmp.eq.s32.totalorder %s31, 1
      %p173 = por %p171, %p172
      %p174 = scmp.ne.s32.totalorder %s165, %s166
      %p175 = scmp.eq.s32.totalorder %s31, 0
      %p176 = por %p174, %p175
      %p177 = scmp.ne.s32.totalorder %s165, %s166
      %p178 = scmp.eq.s32.totalorder %s32, 1
      %p179 = por %p177, %p178
      %p181 = scmp.ne.s32.totalorder %s166, %s180
      %p182 = scmp.eq.s32.totalorder %s32, 0
      %p183 = por %p181, %p182
      %s185 = sadd.s32 %s184, 1
      %p188 = scmp.eq.s32.totalorder %s26, 1
      %p189 = scmp.ne.s32.totalorder %s184, %s186
      %p190 = scmp.eq.s32.totalorder %s26, 0
      %p191 = por %p189, %p190
      %p192 = scmp.ne.s32.totalorder %s184, %s186
      %p193 = scmp.eq.s32.totalorder %s31, 1
      %p194 = por %p192, %p193
      %p195 = scmp.ne.s32.totalorder %s186, %s187
      %p196 = scmp.eq.s32.totalorder %s31, 0
      %p197 = por %p195, %p196
      %p198 = scmp.ne.s32.totalorder %s186, %s187
      %p199 = scmp.eq.s32.totalorder %s32, 1
      %p200 = por %p198, %p199
      %p202 = scmp.ne.s32.totalorder %s187, %s201
      %p203 = scmp.eq.s32.totalorder %s32, 0
      %p204 = por %p202, %p203
      %s206 = sadd.s32 %s205, 1
      %p209 = scmp.eq.s32.totalorder %s26, 1
      %p210 = scmp.ne.s32.totalorder %s205, %s207
      %p211 = scmp.eq.s32.totalorder %s26, 0
      %p212 = por %p210, %p211
      %p213 = scmp.ne.s32.totalorder %s205, %s207
      %p214 = scmp.eq.s32.totalorder %s31, 1
      %p215 = por %p213, %p214
      %p216 = scmp.ne.s32.totalorder %s207, %s208
      %p217 = scmp.eq.s32.totalorder %s31, 0
      %p218 = por %p216, %p217
      %p219 = scmp.ne.s32.totalorder %s207, %s208
      %p220 = scmp.eq.s32.totalorder %s32, 1
      %p221 = por %p219, %p220
      %p223 = scmp.ne.s32.totalorder %s208, %s222
      %p224 = scmp.eq.s32.totalorder %s32, 0
      %p225 = por %p223, %p224
      %s227 = sadd.s32 %s226, 1
      %p230 = scmp.eq.s32.totalorder %s26, 1
      %p231 = scmp.ne.s32.totalorder %s226, %s228
      %p232 = scmp.eq.s32.totalorder %s26, 0
      %p233 = por %p231, %p232
      %p234 = scmp.ne.s32.totalorder %s226, %s228
      %p235 = scmp.eq.s32.totalorder %s31, 1
      %p236 = por %p234, %p235
      %p237 = scmp.ne.s32.totalorder %s228, %s229
      %p238 = scmp.eq.s32.totalorder %s31, 0
      %p239 = por %p237, %p238
      %p240 = scmp.ne.s32.totalorder %s228, %s229
      %p241 = scmp.eq.s32.totalorder %s32, 1
      %p242 = por %p240, %p241
      %p244 = scmp.ne.s32.totalorder %s229, %s243
      %p245 = scmp.eq.s32.totalorder %s32, 0
      %p246 = por %p244, %p245
      %s248 = sadd.s32 %s247, 1
      %p251 = scmp.eq.s32.totalorder %s26, 1
      %p252 = scmp.ne.s32.totalorder %s247, %s249
      %p253 = scmp.eq.s32.totalorder %s26, 0
      %p254 = por %p252, %p253
      %p255 = scmp.ne.s32.totalorder %s247, %s249
      %p256 = scmp.eq.s32.totalorder %s31, 1
      %p257 = por %p255, %p256
      %p258 = scmp.ne.s32.totalorder %s249, %s250
      %p259 = scmp.eq.s32.totalorder %s31, 0
      %p260 = por %p258, %p259
      %p261 = scmp.ne.s32.totalorder %s249, %s250
      %p262 = scmp.eq.s32.totalorder %s32, 1
      %p263 = por %p261, %p262
      %p265 = scmp.ne.s32.totalorder %s250, %s264
      %p266 = scmp.eq.s32.totalorder %s32, 0
      %p267 = por %p265, %p266
      %s268 = ssub.s32 %s33, %s45
      %s269 = ssub.s32 %s34, %s41
      %s270 = sor.u32 %s268, %s269
      %p271 = scmp.eq.s32.totalorder %s270, 0
      %s273 = sadd.s32 %s272, 1
      %s274 = scalar_select %p271, %s272, %s273
      %p277 = pneg %p271
      %p278 = scmp.eq.s32.totalorder %s26, 1
      %p279 = por %p277, %p278
      %p280 = scmp.ne.s32.totalorder %s272, %s275
      %p281 = scmp.eq.s32.totalorder %s26, 0
      %p282 = por %p280, %p281
      %p283 = scmp.ne.s32.totalorder %s272, %s275
      %p284 = scmp.eq.s32.totalorder %s31, 1
      %p285 = por %p283, %p284
      %p286 = scmp.ne.s32.totalorder %s275, %s276
      %p287 = scmp.eq.s32.totalorder %s31, 0
      %p288 = por %p286, %p287
      %p289 = scmp.ne.s32.totalorder %s275, %s276
      %p290 = scmp.eq.s32.totalorder %s32, 1
      %p291 = por %p289, %p290
      %p293 = scmp.ne.s32.totalorder %s276, %s292
      %p294 = scmp.eq.s32.totalorder %s32, 0
      %p295 = por %p293, %p294
      %p296 = scmp.le.s32.totalorder 1, %s26
      %p297 = scmp.lt.s32.totalorder %s26, 3
      %p298 = pnand %p296, %p297
      %p299 = pneg %p298
      // Predicated region
      $region9: #{tpu_custom_call.1} parent=5 // pred_check
        _
      $region10: #{tpu_custom_call.1} parent=5 // pred_check_branch
        %301 = sbr.rel (%p298) target = $region12
      $region11: #{tpu_custom_call.1} parent=5 // pred_region
        %s302 = ssub.s32 %s26, 1
        // Predicated region
        $region13: #{tpu_custom_call.1} parent=11 // pred_check
          %p303 = pneg %p113
        $region14: #{tpu_custom_call.1} parent=11 // pred_check_branch
          %305 = sbr.rel (%p303) target = $region16
        $region15: #{tpu_custom_call.1} parent=11 // pred_region
          %s307 = ssub.s32 256, 256
          %308 = vsyncadd [#allocation9], %s307
          %s309 = sshll.u32 [#allocation10], 4
          %s310 = int_to_ptr.vmem [resolvable:$true] %s309
          %315 = dma.hbm_to_vmem [thread:$0]  %s2, 256, %s310, [#allocation9], 64, 64, 4
        $region16: #{tpu_custom_call.1} parent=11 // pred_fallthru
          _
        // Predicated region
        $region17: #{tpu_custom_call.1} parent=11 // pred_check
          %p316 = pneg %p134
        $region18: #{tpu_custom_call.1} parent=11 // pred_check_branch
          %318 = sbr.rel (%p316) target = $region20
        $region19: #{tpu_custom_call.1} parent=11 // pred_region
          _
        $region20: #{tpu_custom_call.1} parent=11 // pred_fallthru
          _
        // Predicated region
        $region21: #{tpu_custom_call.1} parent=11 // pred_check
          %p319 = pneg %p155
        $region22: #{tpu_custom_call.1} parent=11 // pred_check_branch
          %321 = sbr.rel (%p319) target = $region24
        $region23: #{tpu_custom_call.1} parent=11 // pred_region
          %s323 = ssub.s32 256, 256
          %324 = vsyncadd [#allocation12], %s323
          %s325 = sshll.u32 [#allocation11], 4
          %s326 = int_to_ptr.vmem [resolvable:$true] %s325
          %331 = dma.hbm_to_vmem [thread:$0]  %s4, 256, %s326, [#allocation12], 64, 64, 4
        $region24: #{tpu_custom_call.1} parent=11 // pred_fallthru
          _
        // Predicated region
        $region25: #{tpu_custom_call.1} parent=11 // pred_check
          %p332 = pneg %p176
        $region26: #{tpu_custom_call.1} parent=11 // pred_check_branch
          %334 = sbr.rel (%p332) target = $region28
        $region27: #{tpu_custom_call.1} parent=11 // pred_region
          _
        $region28: #{tpu_custom_call.1} parent=11 // pred_fallthru
          _
        // Predicated region
        $region29: #{tpu_custom_call.1} parent=11 // pred_check
          %p335 = pneg %p197
        $region30: #{tpu_custom_call.1} parent=11 // pred_check_branch
          %337 = sbr.rel (%p335) target = $region32
        $region31: #{tpu_custom_call.1} parent=11 // pred_region
          _
        $region32: #{tpu_custom_call.1} parent=11 // pred_fallthru
          _
        // Predicated region
        $region33: #{tpu_custom_call.1} parent=11 // pred_check
          %p338 = pneg %p218
        $region34: #{tpu_custom_call.1} parent=11 // pred_check_branch
          %340 = sbr.rel (%p338) target = $region36
        $region35: #{tpu_custom_call.1} parent=11 // pred_region
          _
        $region36: #{tpu_custom_call.1} parent=11 // pred_fallthru
          _
        // Predicated region
        $region37: #{tpu_custom_call.1} parent=11 // pred_check
          %p341 = pneg %p239
        $region38: #{tpu_custom_call.1} parent=11 // pred_check_branch
          %343 = sbr.rel (%p341) target = $region40
        $region39: #{tpu_custom_call.1} parent=11 // pred_region
          %s345 = ssub.s32 256, 256
          %346 = vsyncadd [#allocation12], %s345
          %s347 = sshll.u32 [#allocation13], 4
          %s348 = int_to_ptr.vmem [resolvable:$true] %s347
          %353 = dma.hbm_to_vmem [thread:$0]  %s8, 256, %s348, [#allocation12], 64, 64, 4
        $region40: #{tpu_custom_call.1} parent=11 // pred_fallthru
          _
        // Predicated region
        $region41: #{tpu_custom_call.1} parent=11 // pred_check
          %p354 = pneg %p260
        $region42: #{tpu_custom_call.1} parent=11 // pred_check_branch
          %356 = sbr.rel (%p354) target = $region44
        $region43: #{tpu_custom_call.1} parent=11 // pred_region
          _
        $region44: #{tpu_custom_call.1} parent=11 // pred_fallthru
          _
      $region12: #{tpu_custom_call.1} parent=5 // pred_fallthru
        _
      %p357 = scmp.lt.s32.totalorder %s26, 2
      // Predicated region
      $region45: #{tpu_custom_call.1} parent=5 // pred_check
        %p358 = pneg %p357
      $region46: #{tpu_custom_call.1} parent=5 // pred_check_branch
        %360 = sbr.rel (%p358) target = $region48
      $region47: #{tpu_custom_call.1} parent=5 // pred_region
        // Predicated region
        $region49: #{tpu_custom_call.1} parent=47 // pred_check
          %p361 = pneg %p58
        $region50: #{tpu_custom_call.1} parent=47 // pred_check_branch
          %363 = sbr.rel (%p361) target = $region52
        $region51: #{tpu_custom_call.1} parent=47 // pred_region
          %s364 = sand.u32 %s48, 1
          %s365 = scalar_lea.sflag [#allocation6], %s364
          %s366 = sand.u32 %s48, 1
          %s367 = smul.addr %s366, 4
          %s368 = scalar_lea.vmem [#allocation5], %s367
          %s370 = ssub.s32 64, 64
          %371 = vsyncadd %s365, %s370
          %s372 = smul.addr %s33, 64
          %s373 = scalar_lea.hbm %s0, %s372
          %s375 = sshll.u32 %s368, 4
          %s376 = int_to_ptr.vmem [resolvable:$true] %s375
          %378 = dma.hbm_to_vmem [thread:$0]  %s373, 64, %s376, %s365
        $region52: #{tpu_custom_call.1} parent=47 // pred_fallthru
          _
        // Predicated region
        $region53: #{tpu_custom_call.1} parent=47 // pred_check
          %p379 = pneg %p86
        $region54: #{tpu_custom_call.1} parent=47 // pred_check_branch
          %381 = sbr.rel (%p379) target = $region56
        $region55: #{tpu_custom_call.1} parent=47 // pred_region
          %s382 = sand.u32 %s26, 1
          %s383 = scalar_lea.sflag [#allocation9], %s382
          %s384 = sand.u32 %s76, 1
          %s385 = smul.addr %s384, 8
          %s386 = scalar_lea.vmem [#allocation8], %s385
          %s388 = ssub.s32 128, 128
          %389 = vsyncadd %s383, %s388
          %s390 = sadd.s32 %s34, %s33
          %s391 = smul.addr %s390, 128
          %s392 = scalar_lea.hbm %s1, %s391
          %s394 = sshll.u32 %s386, 4
          %s395 = int_to_ptr.vmem [resolvable:$true] %s394
          %397 = dma.hbm_to_vmem [thread:$0]  %s392, 128, %s395, %s383
        $region56: #{tpu_custom_call.1} parent=47 // pred_fallthru
          _
      $region48: #{tpu_custom_call.1} parent=5 // pred_fallthru
        _
      %p398 = scmp.le.s32.totalorder 1, %s26
      %p399 = scmp.lt.s32.totalorder %s26, 3
      %p400 = pnand %p398, %p399
      %p401 = pneg %p400
      // Predicated region
      $region57: #{tpu_custom_call.1} parent=5 // pred_check
        _
      $region58: #{tpu_custom_call.1} parent=5 // pred_check_branch
        %403 = sbr.rel (%p400) target = $region60
      $region59: #{tpu_custom_call.1} parent=5 // pred_region
        %s404 = ssub.s32 %s26, 1
        %s405 = sand.u32 %s51, 1
        %s406 = scalar_lea.sflag [#allocation6], %s405
        %s407 = sand.u32 %s51, 1
        %s408 = smul.addr %s407, 4
        %s409 = scalar_lea.vmem [#allocation5], %s408
        // Predicated region
        $region61: #{tpu_custom_call.1} parent=59 // pred_check
          %p410 = pneg %p64
        $region62: #{tpu_custom_call.1} parent=59 // pred_check_branch
          %412 = sbr.rel (%p410) target = $region64
        $region63: #{tpu_custom_call.1} parent=59 // pred_region
          %413 = dma.done %s406, 64
        $region64: #{tpu_custom_call.1} parent=59 // pred_fallthru
          _
        %s414 = sand.u32 %s31, 1
        %s415 = scalar_lea.sflag [#allocation9], %s414
        %s416 = sand.u32 %s79, 1
        %s417 = smul.addr %s416, 8
        %s418 = scalar_lea.vmem [#allocation8], %s417
        // Predicated region
        $region65: #{tpu_custom_call.1} parent=59 // pred_check
          %p419 = pneg %p92
        $region66: #{tpu_custom_call.1} parent=59 // pred_check_branch
          %421 = sbr.rel (%p419) target = $region68
        $region67: #{tpu_custom_call.1} parent=59 // pred_region
          %422 = dma.done %s415, 128
        $region68: #{tpu_custom_call.1} parent=59 // pred_fallthru
          _
        // Predicated region
        $region69: #{tpu_custom_call.1} parent=59 // pred_check
          %p423 = pneg %p113
        $region70: #{tpu_custom_call.1} parent=59 // pred_check_branch
          %425 = sbr.rel (%p423) target = $region72
        $region71: #{tpu_custom_call.1} parent=59 // pred_region
          %426 = dma.done [#allocation9], 256
        $region72: #{tpu_custom_call.1} parent=59 // pred_fallthru
          _
        // Predicated region
        $region73: #{tpu_custom_call.1} parent=59 // pred_check
          %p427 = pneg %p155
        $region74: #{tpu_custom_call.1} parent=59 // pred_check_branch
          %429 = sbr.rel (%p427) target = $region76
        $region75: #{tpu_custom_call.1} parent=59 // pred_region
          %430 = dma.done [#allocation12], 256
        $region76: #{tpu_custom_call.1} parent=59 // pred_fallthru
          _
        // Predicated region
        $region77: #{tpu_custom_call.1} parent=59 // pred_check
          %p431 = pneg %p239
        $region78: #{tpu_custom_call.1} parent=59 // pred_check_branch
          %433 = sbr.rel (%p431) target = $region80
        $region79: #{tpu_custom_call.1} parent=59 // pred_region
          %434 = dma.done [#allocation12], 256
        $region80: #{tpu_custom_call.1} parent=59 // pred_fallthru
          _
        %s435 = sand.u32 %s51, 1
        %s436 = scalar_lea.sflag [#allocation6], %s435
        %s437 = sand.u32 %s51, 1
        %s438 = smul.addr %s437, 4
        %s439 = scalar_lea.vmem [#allocation5], %s438
        %p440 = pneg %p64
        %p441 = pneg %p61
        %s442 = sand.u32 %s31, 1
        %s443 = scalar_lea.sflag [#allocation9], %s442
        %s444 = sand.u32 %s79, 1
        %s445 = smul.addr %s444, 8
        %s446 = scalar_lea.vmem [#allocation8], %s445
        %p447 = pneg %p92
        %p448 = pneg %p89
        %p449 = pneg %p113
        %p450 = pneg %p110
        %p451 = pneg %p134
        %p452 = pneg %p131
        %p453 = pneg %p155
        %p454 = pneg %p152
        %p455 = pneg %p176
        %p456 = pneg %p173
        %p457 = pneg %p197
        %p458 = pneg %p194
        %p459 = pneg %p218
        %p460 = pneg %p215
        %p461 = pneg %p239
        %p462 = pneg %p236
        %p463 = pneg %p260
        %p464 = pneg %p257
        %p465 = pneg %p288
        %p466 = pneg %p285
        %s467 = sand.u32 %s275, 1
        %s468 = scalar_lea.sflag [#allocation7], %s467
        %s469 = sand.u32 %s275, 1
        %s470 = smul.addr %s469, 8
        %s471 = scalar_lea.vmem [#allocation14], %s470
        %p473 = scmp.eq.s32.totalorder %s36, 0
        // Predicated region
        $region81: #{tpu_custom_call.1} parent=59 // pred_check
          %p474 = pneg %p473
        $region82: #{tpu_custom_call.1} parent=59 // pred_check_branch
          %476 = sbr.rel (%p474) target = $region84
        $region83: #{tpu_custom_call.1} parent=59 // pred_region
          %v477 = vld [vmem:[%s409] sm:$0xf]
          %v478 = vld [vmem:[#allocation11] sm:$0xf]
          %v479 = vld [vmem:[#allocation11 + $0x4] sm:$0xf]
          %v480 = vld [vmem:[#allocation11 + $0x8] sm:$0xf]
          %v481 = vld [vmem:[#allocation11 + $0xc] sm:$0xf]
          %v482 = vld [vmem:[%s5] sm:$0x1]
          %v484 = vlaneseq
          %v485 = vshrl.u32 %v484, 7
          %v486 = vsub.s32 0, %v485
          %v487 = vrot.slane %v482, %v486
          %v493 = vunpack.c.l.b16 %v478
          %v494 = vunpack.c.l.b16 %v479
          %v495 = vunpack.c.l.b16 %v480
          %v496 = vunpack.c.l.b16 %v481
          %v497 = vpack.c.b16 %v494, %v493
          %v498 = vpack.c.b16 %v496, %v495
          %vm501 = vcmask 261120
          %v503 = vsel %vm501, %v477, 0
          %505 = vmatprep.subr.bf16.mxu0 0
          %506 = vmatpush1.bf16.msra.mxu0 %v497
          %507 = vmatprep.subr.bf16.mxu0 0
          %508 = vmatpush1.bf16.msra.mxu0 %v498
          %509 = vmatprep.subr.bf16.mxu0 0
          %510 = vmatpush1.bf16.msra.mxu0 0
          %511 = vmatprep.subr.bf16.mxu0 0
          %512 = vmatpush1.bf16.msra.mxu0 0
          %513 = vmatprep.subr.bf16.mxu0 0
          %514 = vmatpush1.bf16.msra.mxu0 0
          %515 = vmatprep.subr.bf16.mxu0 0
          %516 = vmatpush1.bf16.msra.mxu0 0
          %517 = vmatprep.subr.bf16.mxu0 0
          %518 = vmatpush1.bf16.msra.mxu0 0
          %519 = vmatprep.subr.bf16.mxu0 0
          %520 = vmatpush1.bf16.msra.mxu0 0
          %521 = vmatprep.subr.bf16.mxu0 0
          %522 = vmatpush1.bf16.msra.mxu0 0
          %523 = vmatprep.subr.bf16.mxu0 0
          %524 = vmatpush1.bf16.msra.mxu0 0
          %525 = vmatprep.subr.bf16.mxu0 0
          %526 = vmatpush1.bf16.msra.mxu0 0
          %527 = vmatprep.subr.bf16.mxu0 0
          %528 = vmatpush1.bf16.msra.mxu0 0
          %529 = vmatprep.subr.bf16.mxu0 0
          %530 = vmatpush1.bf16.msra.mxu0 0
          %531 = vmatprep.subr.bf16.mxu0 0
          %532 = vmatpush1.bf16.msra.mxu0 0
          %533 = vmatprep.subr.bf16.mxu0 0
          %534 = vmatpush1.bf16.msra.mxu0 0
          %535 = vmatprep.subr.bf16.mxu0 0
          %536 = vmatpush1.bf16.msra.mxu0 0
          %537 = vmatprep.mubr.bf16.mxu0 0
          %538 = vmatmul.mubr.bf16.gmra.mrb[0].mxu0 %v503
          %v539 = vpop.f32.mrb[0].mxu0
          %v540 = vadd.f32 %v487, %v539
          %v541 = vpop.f32.mrb[0].mxu0
          %v542 = vpop.f32.mrb[0].mxu0
          %v543 = vpop.f32.mrb[0].mxu0
          %544 = vdwg.mxu0
          %v545 = vld [vmem:[%s6] sm:$0xf]
          %v546 = vld [vmem:[%s6 + $0x4] sm:$0xf]
          %v547 = vld [vmem:[%s6 + $0x8] sm:$0xf]
          %v548 = vld [vmem:[%s6 + $0xc] sm:$0xf]
          %v549 = vld [vmem:[%s7] sm:$0x1]
          %v551 = vlaneseq
          %v552 = vshrl.u32 %v551, 7
          %v553 = vsub.s32 0, %v552
          %v554 = vrot.slane %v549, %v553
          %v560 = vunpack.c.l.b16 %v545
          %v561 = vunpack.c.l.b16 %v546
          %v562 = vunpack.c.l.b16 %v547
          %v563 = vunpack.c.l.b16 %v548
          %v564 = vpack.c.b16 %v561, %v560
          %v565 = vpack.c.b16 %v563, %v562
          %568 = vmatprep.subr.bf16.mxu0 0
          %569 = vmatpush1.bf16.msra.mxu0 %v564
          %570 = vmatprep.subr.bf16.mxu0 0
          %571 = vmatpush1.bf16.msra.mxu0 %v565
          %572 = vmatprep.subr.bf16.mxu0 0
          %573 = vmatpush1.bf16.msra.mxu0 0
          %574 = vmatprep.subr.bf16.mxu0 0
          %575 = vmatpush1.bf16.msra.mxu0 0
          %576 = vmatprep.subr.bf16.mxu0 0
          %577 = vmatpush1.bf16.msra.mxu0 0
          %578 = vmatprep.subr.bf16.mxu0 0
          %579 = vmatpush1.bf16.msra.mxu0 0
          %580 = vmatprep.subr.bf16.mxu0 0
          %581 = vmatpush1.bf16.msra.mxu0 0
          %582 = vmatprep.subr.bf16.mxu0 0
          %583 = vmatpush1.bf16.msra.mxu0 0
          %584 = vmatprep.subr.bf16.mxu0 0
          %585 = vmatpush1.bf16.msra.mxu0 0
          %586 = vmatprep.subr.bf16.mxu0 0
          %587 = vmatpush1.bf16.msra.mxu0 0
          %588 = vmatprep.subr.bf16.mxu0 0
          %589 = vmatpush1.bf16.msra.mxu0 0
          %590 = vmatprep.subr.bf16.mxu0 0
          %591 = vmatpush1.bf16.msra.mxu0 0
          %592 = vmatprep.subr.bf16.mxu0 0
          %593 = vmatpush1.bf16.msra.mxu0 0
          %594 = vmatprep.subr.bf16.mxu0 0
          %595 = vmatpush1.bf16.msra.mxu0 0
          %596 = vmatprep.subr.bf16.mxu0 0
          %597 = vmatpush1.bf16.msra.mxu0 0
          %598 = vmatprep.subr.bf16.mxu0 0
          %599 = vmatpush1.bf16.msra.mxu0 0
          %600 = vmatprep.mubr.bf16.mxu0 0
          %601 = vmatmul.mubr.bf16.gmra.mrb[0].mxu0 %v503
          %v602 = vpop.f32.mrb[0].mxu0
          %v603 = vadd.f32 %v554, %v602
          %v604 = vpop.f32.mrb[0].mxu0
          %v605 = vpop.f32.mrb[0].mxu0
          %v606 = vpop.f32.mrb[0].mxu0
          %607 = vdwg.mxu0
          %v608 = vpack.c.bf16 %v540, %v540
          %vm609 = vcmask 257024
          %610 = vst.msk [vmem:[#allocation2] sm:$0xf] %vm609, %v608
          %v611 = vpack.c.bf16 %v603, %v603
          %612 = vst.msk [vmem:[#allocation3] sm:$0xf] %vm609, %v611
        $region84: #{tpu_custom_call.1} parent=59 // pred_fallthru
          _
        %s613 = smul.u32 %s36, 8
        %s614 = sshra.s32 %s613, 3
        %s615 = sand.u32 %s613, 7
        %s616 = smul.addr %s614, 4
        %s617 = scalar_lea.vmem %s409, %s616 [#allocation5]
        %v618 = vld [vmem:[%s617] sm:$0xf]
        %v619 = vld [vmem:[#allocation10] sm:$0xf]
        %v620 = vld [vmem:[#allocation10 + $0x4] sm:$0xf]
        %v621 = vld [vmem:[#allocation10 + $0x8] sm:$0xf]
        %v622 = vld [vmem:[#allocation10 + $0xc] sm:$0xf]
        %v623 = vld [vmem:[%s3] sm:$0x1]
        %v625 = vlaneseq
        %v626 = vshrl.u32 %v625, 7
        %v627 = vsub.s32 0, %v626
        %v628 = vrot.slane %v623, %v627
        %v634 = vunpack.c.l.b16 %v619
        %v635 = vunpack.c.l.b16 %v620
        %v636 = vunpack.c.l.b16 %v621
        %v637 = vunpack.c.l.b16 %v622
        %v638 = vpack.c.b16 %v635, %v634
        %v639 = vpack.c.b16 %v637, %v636
        %vm642 = vcmask 261120
        %v644 = vsel %vm642, %v618, 0
        %646 = vmatprep.subr.bf16.mxu0 0
        %647 = vmatpush1.bf16.msra.mxu0 %v638
        %648 = vmatprep.subr.bf16.mxu0 0
        %649 = vmatpush1.bf16.msra.mxu0 %v639
        %650 = vmatprep.subr.bf16.mxu0 0
        %651 = vmatpush1.bf16.msra.mxu0 0
        %652 = vmatprep.subr.bf16.mxu0 0
        %653 = vmatpush1.bf16.msra.mxu0 0
        %654 = vmatprep.subr.bf16.mxu0 0
        %655 = vmatpush1.bf16.msra.mxu0 0
        %656 = vmatprep.subr.bf16.mxu0 0
        %657 = vmatpush1.bf16.msra.mxu0 0
        %658 = vmatprep.subr.bf16.mxu0 0
        %659 = vmatpush1.bf16.msra.mxu0 0
        %660 = vmatprep.subr.bf16.mxu0 0
        %661 = vmatpush1.bf16.msra.mxu0 0
        %662 = vmatprep.subr.bf16.mxu0 0
        %663 = vmatpush1.bf16.msra.mxu0 0
        %664 = vmatprep.subr.bf16.mxu0 0
        %665 = vmatpush1.bf16.msra.mxu0 0
        %666 = vmatprep.subr.bf16.mxu0 0
        %667 = vmatpush1.bf16.msra.mxu0 0
        %668 = vmatprep.subr.bf16.mxu0 0
        %669 = vmatpush1.bf16.msra.mxu0 0
        %670 = vmatprep.subr.bf16.mxu0 0
        %671 = vmatpush1.bf16.msra.mxu0 0
        %672 = vmatprep.subr.bf16.mxu0 0
        %673 = vmatpush1.bf16.msra.mxu0 0
        %674 = vmatprep.subr.bf16.mxu0 0
        %675 = vmatpush1.bf16.msra.mxu0 0
        %676 = vmatprep.subr.bf16.mxu0 0
        %677 = vmatpush1.bf16.msra.mxu0 0
        %678 = vmatprep.mubr.bf16.mxu0 0
        %679 = vmatmul.mubr.bf16.gmra.mrb[0].mxu0 %v644
        %v680 = vpop.f32.mrb[0].mxu0
        %v681 = vadd.f32 %v628, %v680
        %v682 = vpop.f32.mrb[0].mxu0
        %v683 = vpop.f32.mrb[0].mxu0
        %v684 = vpop.f32.mrb[0].mxu0
        %685 = vdwg.mxu0
        %v686 = vpack.c.bf16 %v681, %v681
        %v687 = vld [vmem:[%s418] sm:$0xff]
        %v688 = vld [vmem:[#allocation2] sm:$0xf]
        %v689 = vld [vmem:[#allocation3] sm:$0xf]
        %vm690 = vcmask 64512
        %v692 = vsel %vm690, %v686, 0
        %v695 = vsel %vm690, %v688, 0
        %697 = vmatprep.subr.bf16.mxu0 0
        %698 = vmatpush1.bf16.xpose.msra.mxu0 %v695
        %699 = vmatprep.subr.bf16.mxu0 0
        %700 = vmatpush1.bf16.xpose.msra.mxu0 0
        %701 = vmatprep.subr.bf16.mxu0 0
        %702 = vmatpush1.bf16.xpose.msra.mxu0 0
        %703 = vmatprep.subr.bf16.mxu0 0
        %704 = vmatpush1.bf16.xpose.msra.mxu0 0
        %705 = vmatprep.subr.bf16.mxu0 0
        %706 = vmatpush1.bf16.xpose.msra.mxu0 0
        %707 = vmatprep.subr.bf16.mxu0 0
        %708 = vmatpush1.bf16.xpose.msra.mxu0 0
        %709 = vmatprep.subr.bf16.mxu0 0
        %710 = vmatpush1.bf16.xpose.msra.mxu0 0
        %711 = vmatprep.subr.bf16.mxu0 0
        %712 = vmatpush1.bf16.xpose.msra.mxu0 0
        %713 = vmatprep.subr.bf16.mxu0 0
        %714 = vmatpush1.bf16.xpose.msra.mxu0 0
        %715 = vmatprep.subr.bf16.mxu0 0
        %716 = vmatpush1.bf16.xpose.msra.mxu0 0
        %717 = vmatprep.subr.bf16.mxu0 0
        %718 = vmatpush1.bf16.xpose.msra.mxu0 0
        %719 = vmatprep.subr.bf16.mxu0 0
        %720 = vmatpush1.bf16.xpose.msra.mxu0 0
        %721 = vmatprep.subr.bf16.mxu0 0
        %722 = vmatpush1.bf16.xpose.msra.mxu0 0
        %723 = vmatprep.subr.bf16.mxu0 0
        %724 = vmatpush1.bf16.xpose.msra.mxu0 0
        %725 = vmatprep.subr.bf16.mxu0 0
        %726 = vmatpush1.bf16.xpose.msra.mxu0 0
        %727 = vmatprep.subr.bf16.mxu0 0
        %728 = vmatpush1.bf16.xpose.msra.mxu0 0
        %729 = vmatprep.mubr.bf16.mxu0 0
        %730 = vmatmul.mubr.bf16.gmra.mrb[0].mxu0 %v692
        %v731 = vpop.f32.mrb[0].mxu0
        %v732 = vadd.f32 %v687, %v731
        %v733 = vpop.f32.mrb[0].mxu0
        %v734 = vpop.f32.mrb[0].mxu0
        %v735 = vpop.f32.mrb[0].mxu0
        %736 = vdwg.mxu0
        %v737 = vsel %vm690, %v732, -inf
        %738 = vmax.xlane.f32.xlu0 %v737
        %v739 = vpop.xlane.xlu0 %738
        %v740 = vsub.f32 %v732, %v739
        %v741 = vmul.f32 %v740, 1.442695
        %v742 = vpow.pop %v741
        %v743 = vsel %vm690, %v742, 0.0
        %744 = vadd.xlane.f32.xlu0 %v743
        %v745 = vpop.xlane.xlu0 %744
        %v746 = vrcp.pop %v745
        %v747 = vmul.f32 %v742, %v746
        %v748 = vpack.c.bf16 %v747, %v747
        %v750 = vsel %vm690, %v748, 0
        %vm752 = vcmask 1043456
        %v754 = vsel %vm752, %v689, 0
        %756 = vmatprep.subr.bf16.mxu0 0
        %757 = vmatpush1.bf16.msra.mxu0 %v754
        %758 = vmatprep.subr.bf16.mxu0 0
        %759 = vmatpush1.bf16.msra.mxu0 0
        %760 = vmatprep.subr.bf16.mxu0 0
        %761 = vmatpush1.bf16.msra.mxu0 0
        %762 = vmatprep.subr.bf16.mxu0 0
        %763 = vmatpush1.bf16.msra.mxu0 0
        %764 = vmatprep.subr.bf16.mxu0 0
        %765 = vmatpush1.bf16.msra.mxu0 0
        %766 = vmatprep.subr.bf16.mxu0 0
        %767 = vmatpush1.bf16.msra.mxu0 0
        %768 = vmatprep.subr.bf16.mxu0 0
        %769 = vmatpush1.bf16.msra.mxu0 0
        %770 = vmatprep.subr.bf16.mxu0 0
        %771 = vmatpush1.bf16.msra.mxu0 0
        %772 = vmatprep.subr.bf16.mxu0 0
        %773 = vmatpush1.bf16.msra.mxu0 0
        %774 = vmatprep.subr.bf16.mxu0 0
        %775 = vmatpush1.bf16.msra.mxu0 0
        %776 = vmatprep.subr.bf16.mxu0 0
        %777 = vmatpush1.bf16.msra.mxu0 0
        %778 = vmatprep.subr.bf16.mxu0 0
        %779 = vmatpush1.bf16.msra.mxu0 0
        %780 = vmatprep.subr.bf16.mxu0 0
        %781 = vmatpush1.bf16.msra.mxu0 0
        %782 = vmatprep.subr.bf16.mxu0 0
        %783 = vmatpush1.bf16.msra.mxu0 0
        %784 = vmatprep.subr.bf16.mxu0 0
        %785 = vmatpush1.bf16.msra.mxu0 0
        %786 = vmatprep.subr.bf16.mxu0 0
        %787 = vmatpush1.bf16.msra.mxu0 0
        %788 = vmatprep.mubr.bf16.mxu0 0
        %789 = vmatmul.mubr.bf16.gmra.mrb[0].mxu0 %v750
        %v790 = vpop.f32.mrb[0].mxu0
        %v791 = vadd.f32 0.0, %v790
        %v792 = vpop.f32.mrb[0].mxu0
        %v793 = vpop.f32.mrb[0].mxu0
        %v794 = vpop.f32.mrb[0].mxu0
        %795 = vdwg.mxu0
        %v796 = vpack.c.bf16 %v791, %v791
        %vm797 = vcmask 60416
        %798 = vst.msk [vmem:[#allocation4] sm:$0xf] %vm797, %v796
        %v799 = vld [vmem:[#allocation2] sm:$0xf]
        %v800 = vld [vmem:[#allocation3] sm:$0xf]
        %802 = vrot.lane.b32.xlu0 %v686, 120
        %v803 = vpop.permute.xlu0 %802
        %v805 = vunpack.c.l.b16 %v799
        %v806 = vpack.c.b16 %v805, %v805
        %807 = vrot.lane.b32.xlu0 %v806, 120
        %v808 = vpop.permute.xlu0 %807
        %v810 = vsel %vm690, %v803, 0
        %v813 = vsel %vm690, %v808, 0
        %815 = vmatprep.subr.bf16.mxu0 0
        %816 = vmatpush1.bf16.xpose.msra.mxu0 %v813
        %817 = vmatprep.subr.bf16.mxu0 0
        %818 = vmatpush1.bf16.xpose.msra.mxu0 0
        %819 = vmatprep.subr.bf16.mxu0 0
        %820 = vmatpush1.bf16.xpose.msra.mxu0 0
        %821 = vmatprep.subr.bf16.mxu0 0
        %822 = vmatpush1.bf16.xpose.msra.mxu0 0
        %823 = vmatprep.subr.bf16.mxu0 0
        %824 = vmatpush1.bf16.xpose.msra.mxu0 0
        %825 = vmatprep.subr.bf16.mxu0 0
        %826 = vmatpush1.bf16.xpose.msra.mxu0 0
        %827 = vmatprep.subr.bf16.mxu0 0
        %828 = vmatpush1.bf16.xpose.msra.mxu0 0
        %829 = vmatprep.subr.bf16.mxu0 0
        %830 = vmatpush1.bf16.xpose.msra.mxu0 0
        %831 = vmatprep.subr.bf16.mxu0 0
        %832 = vmatpush1.bf16.xpose.msra.mxu0 0
        %833 = vmatprep.subr.bf16.mxu0 0
        %834 = vmatpush1.bf16.xpose.msra.mxu0 0
        %835 = vmatprep.subr.bf16.mxu0 0
        %836 = vmatpush1.bf16.xpose.msra.mxu0 0
        %837 = vmatprep.subr.bf16.mxu0 0
        %838 = vmatpush1.bf16.xpose.msra.mxu0 0
        %839 = vmatprep.subr.bf16.mxu0 0
        %840 = vmatpush1.bf16.xpose.msra.mxu0 0
        %841 = vmatprep.subr.bf16.mxu0 0
        %842 = vmatpush1.bf16.xpose.msra.mxu0 0
        %843 = vmatprep.subr.bf16.mxu0 0
        %844 = vmatpush1.bf16.xpose.msra.mxu0 0
        %845 = vmatprep.subr.bf16.mxu0 0
        %846 = vmatpush1.bf16.xpose.msra.mxu0 0
        %847 = vmatprep.mubr.bf16.mxu0 0
        %848 = vmatmul.mubr.bf16.gmra.mrb[0].mxu0 %v810
        %v849 = vpop.f32.mrb[0].mxu0
        %v850 = vadd.f32 %v687, %v849
        %v851 = vpop.f32.mrb[0].mxu0
        %v852 = vpop.f32.mrb[0].mxu0
        %v853 = vpop.f32.mrb[0].mxu0
        %854 = vdwg.mxu0
        %v855 = vsel %vm690, %v850, -inf
        %856 = vmax.xlane.f32.xlu0 %v855
        %v857 = vpop.xlane.xlu0 %856
        %v858 = vsub.f32 %v850, %v857
        %v859 = vmul.f32 %v858, 1.442695
        %v860 = vpow.pop %v859
        %v861 = vsel %vm690, %v860, 0.0
        %862 = vadd.xlane.f32.xlu0 %v861
        %v863 = vpop.xlane.xlu0 %862
        %v864 = vrcp.pop %v863
        %v865 = vmul.f32 %v860, %v864
        %v866 = vpack.c.bf16 %v865, %v865
        %v868 = vunpack.c.l.b16 %v800
        %v869 = vpack.c.b16 %v868, %v868
        %870 = vrot.lane.b32.xlu0 %v869, 120
        %v871 = vpop.permute.xlu0 %870
        %v873 = vsel %vm690, %v866, 0
        %v876 = vsel %vm752, %v871, 0
        %878 = vmatprep.subr.bf16.mxu0 0
        %879 = vmatpush1.bf16.msra.mxu0 %v876
        %880 = vmatprep.subr.bf16.mxu0 0
        %881 = vmatpush1.bf16.msra.mxu0 0
        %882 = vmatprep.subr.bf16.mxu0 0
        %883 = vmatpush1.bf16.msra.mxu0 0
        %884 = vmatprep.subr.bf16.mxu0 0
        %885 = vmatpush1.bf16.msra.mxu0 0
        %886 = vmatprep.subr.bf16.mxu0 0
        %887 = vmatpush1.bf16.msra.mxu0 0
        %888 = vmatprep.subr.bf16.mxu0 0
        %889 = vmatpush1.bf16.msra.mxu0 0
        %890 = vmatprep.subr.bf16.mxu0 0
        %891 = vmatpush1.bf16.msra.mxu0 0
        %892 = vmatprep.subr.bf16.mxu0 0
        %893 = vmatpush1.bf16.msra.mxu0 0
        %894 = vmatprep.subr.bf16.mxu0 0
        %895 = vmatpush1.bf16.msra.mxu0 0
        %896 = vmatprep.subr.bf16.mxu0 0
        %897 = vmatpush1.bf16.msra.mxu0 0
        %898 = vmatprep.subr.bf16.mxu0 0
        %899 = vmatpush1.bf16.msra.mxu0 0
        %900 = vmatprep.subr.bf16.mxu0 0
        %901 = vmatpush1.bf16.msra.mxu0 0
        %902 = vmatprep.subr.bf16.mxu0 0
        %903 = vmatpush1.bf16.msra.mxu0 0
        %904 = vmatprep.subr.bf16.mxu0 0
        %905 = vmatpush1.bf16.msra.mxu0 0
        %906 = vmatprep.subr.bf16.mxu0 0
        %907 = vmatpush1.bf16.msra.mxu0 0
        %908 = vmatprep.subr.bf16.mxu0 0
        %909 = vmatpush1.bf16.msra.mxu0 0
        %910 = vmatprep.mubr.bf16.mxu0 0
        %911 = vmatmul.mubr.bf16.gmra.mrb[0].mxu0 %v873
        %v912 = vpop.f32.mrb[0].mxu0
        %v913 = vadd.f32 0.0, %v912
        %v914 = vpop.f32.mrb[0].mxu0
        %v915 = vpop.f32.mrb[0].mxu0
        %v916 = vpop.f32.mrb[0].mxu0
        %917 = vdwg.mxu0
        %v918 = vpack.c.bf16 %v913, %v913
        %v920 = vunpack.c.l.b16 %v918
        %v921 = vpack.c.b16 %v920, %v920
        %922 = vrot.lane.b32.xlu0 %v921, 8
        %v923 = vpop.permute.xlu0 %922
        %vm925 = vcmask 126016
        %926 = vst.msk [vmem:[#allocation4] sm:$0xf] %vm925, %v923
        %v927 = vld [vmem:[#allocation2] sm:$0xf]
        %v928 = vld [vmem:[#allocation3] sm:$0xf]
        %929 = vrot.lane.b32.xlu0 %v686, 112
        %v930 = vpop.permute.xlu0 %929
        %v932 = vunpack.c.l.b16 %v927
        %v933 = vpack.c.b16 %v932, %v932
        %934 = vrot.lane.b32.xlu0 %v933, 112
        %v935 = vpop.permute.xlu0 %934
        %v937 = vsel %vm690, %v930, 0
        %v940 = vsel %vm690, %v935, 0
        %942 = vmatprep.subr.bf16.mxu0 0
        %943 = vmatpush1.bf16.xpose.msra.mxu0 %v940
        %944 = vmatprep.subr.bf16.mxu0 0
        %945 = vmatpush1.bf16.xpose.msra.mxu0 0
        %946 = vmatprep.subr.bf16.mxu0 0
        %947 = vmatpush1.bf16.xpose.msra.mxu0 0
        %948 = vmatprep.subr.bf16.mxu0 0
        %949 = vmatpush1.bf16.xpose.msra.mxu0 0
        %950 = vmatprep.subr.bf16.mxu0 0
        %951 = vmatpush1.bf16.xpose.msra.mxu0 0
        %952 = vmatprep.subr.bf16.mxu0 0
        %953 = vmatpush1.bf16.xpose.msra.mxu0 0
        %954 = vmatprep.subr.bf16.mxu0 0
        %955 = vmatpush1.bf16.xpose.msra.mxu0 0
        %956 = vmatprep.subr.bf16.mxu0 0
        %957 = vmatpush1.bf16.xpose.msra.mxu0 0
        %958 = vmatprep.subr.bf16.mxu0 0
        %959 = vmatpush1.bf16.xpose.msra.mxu0 0
        %960 = vmatprep.subr.bf16.mxu0 0
        %961 = vmatpush1.bf16.xpose.msra.mxu0 0
        %962 = vmatprep.subr.bf16.mxu0 0
        %963 = vmatpush1.bf16.xpose.msra.mxu0 0
        %964 = vmatprep.subr.bf16.mxu0 0
        %965 = vmatpush1.bf16.xpose.msra.mxu0 0
        %966 = vmatprep.subr.bf16.mxu0 0
        %967 = vmatpush1.bf16.xpose.msra.mxu0 0
        %968 = vmatprep.subr.bf16.mxu0 0
        %969 = vmatpush1.bf16.xpose.msra.mxu0 0
        %970 = vmatprep.subr.bf16.mxu0 0
        %971 = vmatpush1.bf16.xpose.msra.mxu0 0
        %972 = vmatprep.subr.bf16.mxu0 0
        %973 = vmatpush1.bf16.xpose.msra.mxu0 0
        %974 = vmatprep.mubr.bf16.mxu0 0
        %975 = vmatmul.mubr.bf16.gmra.mrb[0].mxu0 %v937
        %v976 = vpop.f32.mrb[0].mxu0
        %v977 = vadd.f32 %v687, %v976
        %v978 = vpop.f32.mrb[0].mxu0
        %v979 = vpop.f32.mrb[0].mxu0
        %v980 = vpop.f32.mrb[0].mxu0
        %981 = vdwg.mxu0
        %v982 = vsel %vm690, %v977, -inf
        %983 = vmax.xlane.f32.xlu0 %v982
        %v984 = vpop.xlane.xlu0 %983
        %v985 = vsub.f32 %v977, %v984
        %v986 = vmul.f32 %v985, 1.442695
        %v987 = vpow.pop %v986
        %v988 = vsel %vm690, %v987, 0.0
        %989 = vadd.xlane.f32.xlu0 %v988
        %v990 = vpop.xlane.xlu0 %989
        %v991 = vrcp.pop %v990
        %v992 = vmul.f32 %v987, %v991
        %v993 = vpack.c.bf16 %v992, %v992
        %v995 = vunpack.c.l.b16 %v928
        %v996 = vpack.c.b16 %v995, %v995
        %997 = vrot.lane.b32.xlu0 %v996, 112
        %v998 = vpop.permute.xlu0 %997
        %v1000 = vsel %vm690, %v993, 0
        %v1003 = vsel %vm752, %v998, 0
        %1005 = vmatprep.subr.bf16.mxu0 0
        %1006 = vmatpush1.bf16.msra.mxu0 %v1003
        %1007 = vmatprep.subr.bf16.mxu0 0
        %1008 = vmatpush1.bf16.msra.mxu0 0
        %1009 = vmatprep.subr.bf16.mxu0 0
        %1010 = vmatpush1.bf16.msra.mxu0 0
        %1011 = vmatprep.subr.bf16.mxu0 0
        %1012 = vmatpush1.bf16.msra.mxu0 0
        %1013 = vmatprep.subr.bf16.mxu0 0
        %1014 = vmatpush1.bf16.msra.mxu0 0
        %1015 = vmatprep.subr.bf16.mxu0 0
        %1016 = vmatpush1.bf16.msra.mxu0 0
        %1017 = vmatprep.subr.bf16.mxu0 0
        %1018 = vmatpush1.bf16.msra.mxu0 0
        %1019 = vmatprep.subr.bf16.mxu0 0
        %1020 = vmatpush1.bf16.msra.mxu0 0
        %1021 = vmatprep.subr.bf16.mxu0 0
        %1022 = vmatpush1.bf16.msra.mxu0 0
        %1023 = vmatprep.subr.bf16.mxu0 0
        %1024 = vmatpush1.bf16.msra.mxu0 0
        %1025 = vmatprep.subr.bf16.mxu0 0
        %1026 = vmatpush1.bf16.msra.mxu0 0
        %1027 = vmatprep.subr.bf16.mxu0 0
        %1028 = vmatpush1.bf16.msra.mxu0 0
        %1029 = vmatprep.subr.bf16.mxu0 0
        %1030 = vmatpush1.bf16.msra.mxu0 0
        %1031 = vmatprep.subr.bf16.mxu0 0
        %1032 = vmatpush1.bf16.msra.mxu0 0
        %1033 = vmatprep.subr.bf16.mxu0 0
        %1034 = vmatpush1.bf16.msra.mxu0 0
        %1035 = vmatprep.subr.bf16.mxu0 0
        %1036 = vmatpush1.bf16.msra.mxu0 0
        %1037 = vmatprep.mubr.bf16.mxu0 0
        %1038 = vmatmul.mubr.bf16.gmra.mrb[0].mxu0 %v1000
        %v1039 = vpop.f32.mrb[0].mxu0
        %v1040 = vadd.f32 0.0, %v1039
        %v1041 = vpop.f32.mrb[0].mxu0
        %v1042 = vpop.f32.mrb[0].mxu0
        %v1043 = vpop.f32.mrb[0].mxu0
        %1044 = vdwg.mxu0
        %v1045 = vpack.c.bf16 %v1040, %v1040
        %v1047 = vunpack.c.l.b16 %v1045
        %v1048 = vpack.c.b16 %v1047, %v1047
        %1049 = vrot.lane.b32.xlu0 %v1048, 16
        %v1050 = vpop.permute.xlu0 %1049
        %vm1052 = vcmask 191616
        %1053 = vst.msk [vmem:[#allocation4] sm:$0xf] %vm1052, %v1050
        %v1054 = vld [vmem:[#allocation2] sm:$0xf]
        %v1055 = vld [vmem:[#allocation3] sm:$0xf]
        %1056 = vrot.lane.b32.xlu0 %v686, 104
        %v1057 = vpop.permute.xlu0 %1056
        %v1059 = vunpack.c.l.b16 %v1054
        %v1060 = vpack.c.b16 %v1059, %v1059
        %1061 = vrot.lane.b32.xlu0 %v1060, 104
        %v1062 = vpop.permute.xlu0 %1061
        %v1064 = vsel %vm690, %v1057, 0
        %v1067 = vsel %vm690, %v1062, 0
        %1069 = vmatprep.subr.bf16.mxu0 0
        %1070 = vmatpush1.bf16.xpose.msra.mxu0 %v1067
        %1071 = vmatprep.subr.bf16.mxu0 0
        %1072 = vmatpush1.bf16.xpose.msra.mxu0 0
        %1073 = vmatprep.subr.bf16.mxu0 0
        %1074 = vmatpush1.bf16.xpose.msra.mxu0 0
        %1075 = vmatprep.subr.bf16.mxu0 0
        %1076 = vmatpush1.bf16.xpose.msra.mxu0 0
        %1077 = vmatprep.subr.bf16.mxu0 0
        %1078 = vmatpush1.bf16.xpose.msra.mxu0 0
        %1079 = vmatprep.subr.bf16.mxu0 0
        %1080 = vmatpush1.bf16.xpose.msra.mxu0 0
        %1081 = vmatprep.subr.bf16.mxu0 0
        %1082 = vmatpush1.bf16.xpose.msra.mxu0 0
        %1083 = vmatprep.subr.bf16.mxu0 0
        %1084 = vmatpush1.bf16.xpose.msra.mxu0 0
        %1085 = vmatprep.subr.bf16.mxu0 0
        %1086 = vmatpush1.bf16.xpose.msra.mxu0 0
        %1087 = vmatprep.subr.bf16.mxu0 0
        %1088 = vmatpush1.bf16.xpose.msra.mxu0 0
        %1089 = vmatprep.subr.bf16.mxu0 0
        %1090 = vmatpush1.bf16.xpose.msra.mxu0 0
        %1091 = vmatprep.subr.bf16.mxu0 0
        %1092 = vmatpush1.bf16.xpose.msra.mxu0 0
        %1093 = vmatprep.subr.bf16.mxu0 0
        %1094 = vmatpush1.bf16.xpose.msra.mxu0 0
        %1095 = vmatprep.subr.bf16.mxu0 0
        %1096 = vmatpush1.bf16.xpose.msra.mxu0 0
        %1097 = vmatprep.subr.bf16.mxu0 0
        %1098 = vmatpush1.bf16.xpose.msra.mxu0 0
        %1099 = vmatprep.subr.bf16.mxu0 0
        %1100 = vmatpush1.bf16.xpose.msra.mxu0 0
        %1101 = vmatprep.mubr.bf16.mxu0 0
        %1102 = vmatmul.mubr.bf16.gmra.mrb[0].mxu0 %v1064
        %v1103 = vpop.f32.mrb[0].mxu0
        %v1104 = vadd.f32 %v687, %v1103
        %v1105 = vpop.f32.mrb[0].mxu0
        %v1106 = vpop.f32.mrb[0].mxu0
        %v1107 = vpop.f32.mrb[0].mxu0
        %1108 = vdwg.mxu0
        %v1109 = vsel %vm690, %v1104, -inf
        %1110 = vmax.xlane.f32.xlu0 %v1109
        %v1111 = vpop.xlane.xlu0 %1110
        %v1112 = vsub.f32 %v1104, %v1111
        %v1113 = vmul.f32 %v1112, 1.442695
        %v1114 = vpow.pop %v1113
        %v1115 = vsel %vm690, %v1114, 0.0
        %1116 = vadd.xlane.f32.xlu0 %v1115
        %v1117 = vpop.xlane.xlu0 %1116
        %v1118 = vrcp.pop %v1117
        %v1119 = vmul.f32 %v1114, %v1118
        %v1120 = vpack.c.bf16 %v1119, %v1119
        %v1122 = vunpack.c.l.b16 %v1055
        %v1123 = vpack.c.b16 %v1122, %v1122
        %1124 = vrot.lane.b32.xlu0 %v1123, 104
        %v1125 = vpop.permute.xlu0 %1124
        %v1127 = vsel %vm690, %v1120, 0
        %v1130 = vsel %vm752, %v1125, 0
        %1132 = vmatprep.subr.bf16.mxu0 0
        %1133 = vmatpush1.bf16.msra.mxu0 %v1130
        %1134 = vmatprep.subr.bf16.mxu0 0
        %1135 = vmatpush1.bf16.msra.mxu0 0
        %1136 = vmatprep.subr.bf16.mxu0 0
        %1137 = vmatpush1.bf16.msra.mxu0 0
        %1138 = vmatprep.subr.bf16.mxu0 0
        %1139 = vmatpush1.bf16.msra.mxu0 0
        %1140 = vmatprep.subr.bf16.mxu0 0
        %1141 = vmatpush1.bf16.msra.mxu0 0
        %1142 = vmatprep.subr.bf16.mxu0 0
        %1143 = vmatpush1.bf16.msra.mxu0 0
        %1144 = vmatprep.subr.bf16.mxu0 0
        %1145 = vmatpush1.bf16.msra.mxu0 0
        %1146 = vmatprep.subr.bf16.mxu0 0
        %1147 = vmatpush1.bf16.msra.mxu0 0
        %1148 = vmatprep.subr.bf16.mxu0 0
        %1149 = vmatpush1.bf16.msra.mxu0 0
        %1150 = vmatprep.subr.bf16.mxu0 0
        %1151 = vmatpush1.bf16.msra.mxu0 0
        %1152 = vmatprep.subr.bf16.mxu0 0
        %1153 = vmatpush1.bf16.msra.mxu0 0
        %1154 = vmatprep.subr.bf16.mxu0 0
        %1155 = vmatpush1.bf16.msra.mxu0 0
        %1156 = vmatprep.subr.bf16.mxu0 0
        %1157 = vmatpush1.bf16.msra.mxu0 0
        %1158 = vmatprep.subr.bf16.mxu0 0
        %1159 = vmatpush1.bf16.msra.mxu0 0
        %1160 = vmatprep.subr.bf16.mxu0 0
        %1161 = vmatpush1.bf16.msra.mxu0 0
        %1162 = vmatprep.subr.bf16.mxu0 0
        %1163 = vmatpush1.bf16.msra.mxu0 0
        %1164 = vmatprep.mubr.bf16.mxu0 0
        %1165 = vmatmul.mubr.bf16.gmra.mrb[0].mxu0 %v1127
        %v1166 = vpop.f32.mrb[0].mxu0
        %v1167 = vadd.f32 0.0, %v1166
        %v1168 = vpop.f32.mrb[0].mxu0
        %v1169 = vpop.f32.mrb[0].mxu0
        %v1170 = vpop.f32.mrb[0].mxu0
        %1171 = vdwg.mxu0
        %v1172 = vpack.c.bf16 %v1167, %v1167
        %v1174 = vunpack.c.l.b16 %v1172
        %v1175 = vpack.c.b16 %v1174, %v1174
        %1176 = vrot.lane.b32.xlu0 %v1175, 24
        %v1177 = vpop.permute.xlu0 %1176
        %vm1179 = vcmask 257216
        %1180 = vst.msk [vmem:[#allocation4] sm:$0xf] %vm1179, %v1177
        %v1181 = vld [vmem:[#allocation4] sm:$0xf]
        %v1182 = vld [vmem:[#allocation13] sm:$0xf]
        %v1183 = vld [vmem:[#allocation13 + $0x4] sm:$0xf]
        %v1184 = vld [vmem:[#allocation13 + $0x8] sm:$0xf]
        %v1185 = vld [vmem:[#allocation13 + $0xc] sm:$0xf]
        %v1186 = vld [vmem:[%s9] sm:$0x1]
        %v1188 = vlaneseq
        %v1189 = vshrl.u32 %v1188, 7
        %v1190 = vsub.s32 0, %v1189
        %v1191 = vrot.slane %v1186, %v1190
        %v1197 = vunpack.c.l.b16 %v1182
        %v1198 = vunpack.c.l.b16 %v1183
        %v1199 = vunpack.c.l.b16 %v1184
        %v1200 = vunpack.c.l.b16 %v1185
        %v1201 = vpack.c.b16 %v1198, %v1197
        %v1202 = vpack.c.b16 %v1200, %v1199
        %v1206 = vsel %vm642, %v1181, 0
        %1208 = vmatprep.subr.bf16.mxu0 0
        %1209 = vmatpush1.bf16.msra.mxu0 %v1201
        %1210 = vmatprep.subr.bf16.mxu0 0
        %1211 = vmatpush1.bf16.msra.mxu0 %v1202
        %1212 = vmatprep.subr.bf16.mxu0 0
        %1213 = vmatpush1.bf16.msra.mxu0 0
        %1214 = vmatprep.subr.bf16.mxu0 0
        %1215 = vmatpush1.bf16.msra.mxu0 0
        %1216 = vmatprep.subr.bf16.mxu0 0
        %1217 = vmatpush1.bf16.msra.mxu0 0
        %1218 = vmatprep.subr.bf16.mxu0 0
        %1219 = vmatpush1.bf16.msra.mxu0 0
        %1220 = vmatprep.subr.bf16.mxu0 0
        %1221 = vmatpush1.bf16.msra.mxu0 0
        %1222 = vmatprep.subr.bf16.mxu0 0
        %1223 = vmatpush1.bf16.msra.mxu0 0
        %1224 = vmatprep.subr.bf16.mxu0 0
        %1225 = vmatpush1.bf16.msra.mxu0 0
        %1226 = vmatprep.subr.bf16.mxu0 0
        %1227 = vmatpush1.bf16.msra.mxu0 0
        %1228 = vmatprep.subr.bf16.mxu0 0
        %1229 = vmatpush1.bf16.msra.mxu0 0
        %1230 = vmatprep.subr.bf16.mxu0 0
        %1231 = vmatpush1.bf16.msra.mxu0 0
        %1232 = vmatprep.subr.bf16.mxu0 0
        %1233 = vmatpush1.bf16.msra.mxu0 0
        %1234 = vmatprep.subr.bf16.mxu0 0
        %1235 = vmatpush1.bf16.msra.mxu0 0
        %1236 = vmatprep.subr.bf16.mxu0 0
        %1237 = vmatpush1.bf16.msra.mxu0 0
        %1238 = vmatprep.subr.bf16.mxu0 0
        %1239 = vmatpush1.bf16.msra.mxu0 0
        %1240 = vmatprep.mubr.bf16.mxu0 0
        %1241 = vmatmul.mubr.bf16.gmra.mrb[0].mxu0 %v1206
        %v1242 = vpop.f32.mrb[0].mxu0
        %v1243 = vadd.f32 %v1191, %v1242
        %v1244 = vpop.f32.mrb[0].mxu0
        %v1245 = vpop.f32.mrb[0].mxu0
        %v1246 = vpop.f32.mrb[0].mxu0
        %1247 = vdwg.mxu0
        %1248 = vst.msk [vmem:[%s471] sm:$0xff] %vm642, %v1243
        %s1249 = sand.u32 %s275, 1
        %s1250 = scalar_lea.sflag [#allocation7], %s1249
        %s1251 = sand.u32 %s275, 1
        %s1252 = smul.addr %s1251, 8
        %s1253 = scalar_lea.vmem [#allocation14], %s1252
        // Predicated region
        $region85: #{tpu_custom_call.1} parent=59 // pred_check
          %p1254 = pneg %p285
        $region86: #{tpu_custom_call.1} parent=59 // pred_check_branch
          %1256 = sbr.rel (%p1254) target = $region88
        $region87: #{tpu_custom_call.1} parent=59 // pred_region
          %s1258 = ssub.s32 128, 128
          %1259 = vsyncadd %s1250, %s1258
          %s1260 = sadd.s32 %s36, %s35
          %s1261 = smul.addr %s1260, 128
          %s1262 = scalar_lea.hbm %s10, %s1261
          %s1264 = sshll.u32 %s1253, 4
          %s1265 = int_to_ptr.vmem [resolvable:$true] %s1264
          %1267 = dma.vmem_to_hbm [thread:$0]  %s1265, 128, %s1262, %s1250
        $region88: #{tpu_custom_call.1} parent=59 // pred_fallthru
          _
      $region60: #{tpu_custom_call.1} parent=5 // pred_fallthru
        _
      %p1268 = scmp.le.s32.totalorder 2, %s26
      // Predicated region
      $region89: #{tpu_custom_call.1} parent=5 // pred_check
        %p1269 = pneg %p1268
      $region90: #{tpu_custom_call.1} parent=5 // pred_check_branch
        %1271 = sbr.rel (%p1269) target = $region92
      $region91: #{tpu_custom_call.1} parent=5 // pred_region
        %s1272 = ssub.s32 %s26, 2
        // Predicated region
        $region93: #{tpu_custom_call.1} parent=91 // pred_check
          %p1273 = pneg %p291
        $region94: #{tpu_custom_call.1} parent=91 // pred_check_branch
          %1275 = sbr.rel (%p1273) target = $region96
        $region95: #{tpu_custom_call.1} parent=91 // pred_region
          %s1276 = sand.u32 %s276, 1
          %s1277 = scalar_lea.sflag [#allocation7], %s1276
          %s1278 = sand.u32 %s276, 1
          %s1279 = smul.addr %s1278, 8
          %s1280 = scalar_lea.vmem [#allocation14], %s1279
          %1281 = dma.done %s1277, 128
        $region96: #{tpu_custom_call.1} parent=91 // pred_fallthru
          _
      $region92: #{tpu_custom_call.1} parent=5 // pred_fallthru
        _
    $region6: #{tpu_custom_call.1} parent=1 // loop_footer
      %s30 = sadd.s32 1, %s26
    $region7: #{tpu_custom_call.1} parent=1 // loop_footer_branch
      %25 = sbr.rel target = $region3
    $region8: #{tpu_custom_call.1} parent=1 // loop_exit
      _
    %1282 = vsyncpa [#allocation6], 1
    %s1283 = scalar_lea.sflag [#allocation6], 1
    %1284 = vsyncpa %s1283, 1
    %1285 = vsyncpa [#allocation9], 1
    %s1286 = scalar_lea.sflag [#allocation9], 1
    %1287 = vsyncpa %s1286, 1
    %1288 = vsyncpa [#allocation12], 1
    %1289 = vsyncpa [#allocation7], 1
    %s1290 = scalar_lea.sflag [#allocation7], 1
    %1291 = vsyncpa %s1290, 1

</llo_original>
